<compile_context>
chip_gen: v7x
topology: tpu7x:2x2x1
jax: 0.10.0
libtpu: 0.0.40
codegen_flags: <defaults>
</compile_context>

<pallas_src>
import jax
import jax.numpy as jnp
from jax.experimental import pallas as pl
from jax.experimental.pallas import tpu as pltpu

LANE = 128
OUT_RAW = 2     # real output width of layer4
OUT_PAD = 128   # lane-dense padded output width (unmasked stores)
MAX_TM = 1024   # largest batch tile (multiple of 256)


def _round_up(x, m):
    return (x + m - 1) // m * m


def _pick_tm(batch, max_tm=MAX_TM):
    """Batch tile: small batches get a tight 128-granular tile (no pad-row waste);
    large batches get big 256-granular tiles, capped so the grid has >= 2 steps
    (keeps both v7x TensorCores busy via the 'parallel' batch axis)."""
    b = _round_up(max(batch, 1), 128)
    if b <= 256:
        return b
    half = _round_up(pl.cdiv(b, 2), 256)
    return min(max_tm, half)


def _mlp_kernel(x_ref,
                w1_ref, b1_ref,
                w2_ref, b2_ref,
                w3_ref, b3_ref,
                w4_ref, b4_ref,
                o_ref):
    # x tile: [tm, Fp] bf16; weights bf16 [in, out]; biases f32 [1, out].
    x = x_ref[...]

    # layer1 + ReLU  (bf16 MXU operands, f32 accumulate, f32 bias/ReLU, one cast back)
    z1 = jnp.dot(x, w1_ref[...], preferred_element_type=jnp.float32) + b1_ref[...]
    z1 = jnp.maximum(z1, 0.0).astype(jnp.bfloat16)

    # layer2 + ReLU
    z2 = jnp.dot(z1, w2_ref[...], preferred_element_type=jnp.float32) + b2_ref[...]
    z2 = jnp.maximum(z2, 0.0).astype(jnp.bfloat16)

    # layer3 + ReLU
    z3 = jnp.dot(z2, w3_ref[...], preferred_element_type=jnp.float32) + b3_ref[...]
    z3 = jnp.maximum(z3, 0.0).astype(jnp.bfloat16)

    # layer4 (no activation); output lane-padded to 128 (pad columns are zero)
    y = jnp.dot(z3, w4_ref[...], preferred_element_type=jnp.float32) + b4_ref[...]
    o_ref[...] = y.astype(o_ref.dtype)


def dr_estimator_forward(x, params):
    """x: [B, num_features] float32. params: dict of [in, out] weights / [1, out] biases (f32).

    Returns [B, 2] float32. Batch / feature / output dims are zero-padded internally;
    matmuls run in bf16 with f32 accumulation.
    """
    B, F = x.shape
    # NOTE: 128-alignment of Fp is ideal for v5e (4x128^2 MXU); v6e/v7x could use 256,
    # but layer1/layer4 are only ~20% of FLOPs so the extra zero-work isn't worth it.
    Fp = _round_up(max(F, LANE), LANE)
    tm = _pick_tm(B)
    Bp = _round_up(B, tm)

    # Cast to bf16 first, then pad (halves the pre-kernel padded-copy HBM traffic).
    x_p = jnp.pad(x.astype(jnp.bfloat16), ((0, Bp - B), (0, Fp - F)))

    # Pad w1 rows to Fp (zeros, exact) and layer4 outputs to OUT_PAD (zeros, sliced off).
    w1 = jnp.pad(params["w1"].astype(jnp.bfloat16), ((0, Fp - F), (0, 0)))
    b1 = params["b1"].astype(jnp.float32)
    w2 = params["w2"].astype(jnp.bfloat16)
    b2 = params["b2"].astype(jnp.float32)
    w3 = params["w3"].astype(jnp.bfloat16)
    b3 = params["b3"].astype(jnp.float32)
    w4 = jnp.pad(params["w4"].astype(jnp.bfloat16), ((0, 0), (0, OUT_PAD - OUT_RAW)))
    b4 = jnp.pad(params["b4"].astype(jnp.float32), ((0, 0), (0, OUT_PAD - OUT_RAW)))

    flops = 2 * Bp * (Fp * 256 + 256 * 512 + 512 * 256 + 256 * OUT_PAD)
    bytes_accessed = (x_p.size * 2
                      + (w1.size + w2.size + w3.size + w4.size) * 2
                      + (b1.size + b2.size + b3.size + b4.size) * 4
                      + Bp * OUT_PAD * 4)

    # VMEM budget (double-buffered x/out/weights + f32/bf16 intermediates), 2x headroom,
    # capped below v7x's 64 MiB physical VMEM.
    weight_elems = Fp * 256 + 256 * 512 + 512 * 256 + 256 * OUT_PAD
    bias_elems = 256 + 512 + 256 + OUT_PAD
    vmem_est = (2 * tm * Fp * 2                 # x tile, dbuf, bf16
                + 2 * tm * OUT_PAD * 4          # out tile, dbuf, f32
                + 2 * weight_elems * 2          # bf16 weights, dbuf
                + 2 * bias_elems * 4            # f32 biases, dbuf
                + tm * bias_elems * 4           # f32 intermediates (upper bound)
                + tm * (256 + 512 + 256) * 2)   # bf16 activation casts
    vmem_limit = int(min(48 << 20, max(2 * vmem_est, 16 << 20)))

    def full(arr):
        # Constant index_map -> weights/biases stay resident in VMEM across batch tiles.
        return pl.BlockSpec(arr.shape, lambda i: (0, 0))

    out_p = pl.pallas_call(
        _mlp_kernel,
        out_shape=jax.ShapeDtypeStruct((Bp, OUT_PAD), jnp.float32),
        grid_spec=pltpu.PrefetchScalarGridSpec(
            num_scalar_prefetch=0,
            grid=(Bp // tm,),
            in_specs=[
                pl.BlockSpec((tm, Fp), lambda i: (i, 0)),   # x batch tile
                full(w1), full(b1),
                full(w2), full(b2),
                full(w3), full(b3),
                full(w4), full(b4),
            ],
            out_specs=pl.BlockSpec((tm, OUT_PAD), lambda i: (i, 0)),
        ),
        compiler_params=pltpu.CompilerParams(
            dimension_semantics=("parallel",),
            vmem_limit_bytes=vmem_limit),
        cost_estimate=pl.CostEstimate(
            flops=flops, transcendentals=0, bytes_accessed=bytes_accessed),
    )(x_p, w1, b1, w2, b2, w3, b3, w4, b4)

    # Slice off batch padding and the 126 zero output lanes (free layout plumbing).
    return out_p[:B, :OUT_RAW]


def init_params(num_features, key):
    """Deterministic synthetic init matching the PyTorch layer shapes.

    PyTorch stores Linear weight as [out, in]; here we keep the transposed
    [in, out] layout the kernel consumes."""
    dims = [(num_features, 256), (256, 512), (512, 256), (256, OUT_RAW)]
    params = {}
    for idx, (fan_in, fan_out) in enumerate(dims, start=1):
        key, kw, kb = jax.random.split(key, 3)
        bound = 1.0 / jnp.sqrt(fan_in)
        w = jax.random.uniform(kw, (fan_in, fan_out), jnp.float32, -bound, bound)
        b = jax.random.uniform(kb, (1, fan_out), jnp.float32, -bound, bound)
        params[f"w{idx}"] = w
        params[f"b{idx}"] = b
    return params


def reference_forward(x, params):
    """Pure-JAX f32 reference of the PyTorch forward."""
    z = x
    for i in range(1, 4):
        z = jnp.maximum(z @ params[f"w{i}"] + params[f"b{i}"], 0.0)
    return z @ params["w4"] + params["b4"]


if __name__ == "__main__":
    key = jax.random.PRNGKey(0)
    num_features = 32
    batch = 16

    key, kx = jax.random.split(key)
    x = jax.random.normal(kx, (batch, num_features), jnp.float32)
    params = init_params(num_features, key)

    y = dr_estimator_forward(x, params)
    y = jax.block_until_ready(y)

    y_ref = reference_forward(x, params)
    assert y.shape == (batch, OUT_RAW)
    # bf16 MXU operands with f32 accumulation -> looser tolerance vs f32 reference.
    assert jnp.allclose(y, y_ref, atol=5e-2, rtol=5e-2), "mismatch vs reference"

    # TODO(synk): train_model (Adam loop) is host-side training, not a forward op;
    # not expressed as a Pallas kernel.
    print("KERNEL_OK")
</pallas_src>

<mosaic_0001>
module attributes {stable_mosaic.version = 11 : i64} {
  func.func @_mlp_kernel(%arg0: i32, %arg1: memref<128x128xbf16, #tpu.memory_space<vmem>>, %arg2: memref<128x256xbf16, #tpu.memory_space<vmem>>, %arg3: memref<1x256xf32, #tpu.memory_space<vmem>>, %arg4: memref<256x512xbf16, #tpu.memory_space<vmem>>, %arg5: memref<1x512xf32, #tpu.memory_space<vmem>>, %arg6: memref<512x256xbf16, #tpu.memory_space<vmem>>, %arg7: memref<1x256xf32, #tpu.memory_space<vmem>>, %arg8: memref<256x128xbf16, #tpu.memory_space<vmem>>, %arg9: memref<1x128xf32, #tpu.memory_space<vmem>>, %arg10: memref<128x128xf32, #tpu.memory_space<vmem>>) attributes {dimension_semantics = [#tpu.dimension_semantics<parallel>], iteration_bounds = array<i64: 1>, scalar_prefetch = 0 : i64, scratch_operands = 0 : i64, tpu.core_type = #tpu.core_type<tc>, window_params = [{transform_indices = @transform_0, window_bounds = array<i64: 128, 128>}, {pipeline_mode = #tpu.pipeline_mode<synchronous>, transform_indices = @transform_1, window_bounds = array<i64: 128, 256>}, {pipeline_mode = #tpu.pipeline_mode<synchronous>, transform_indices = @transform_2, window_bounds = array<i64: 1, 256>}, {pipeline_mode = #tpu.pipeline_mode<synchronous>, transform_indices = @transform_3, window_bounds = array<i64: 256, 512>}, {pipeline_mode = #tpu.pipeline_mode<synchronous>, transform_indices = @transform_4, window_bounds = array<i64: 1, 512>}, {pipeline_mode = #tpu.pipeline_mode<synchronous>, transform_indices = @transform_5, window_bounds = array<i64: 512, 256>}, {pipeline_mode = #tpu.pipeline_mode<synchronous>, transform_indices = @transform_6, window_bounds = array<i64: 1, 256>}, {pipeline_mode = #tpu.pipeline_mode<synchronous>, transform_indices = @transform_7, window_bounds = array<i64: 256, 128>}, {pipeline_mode = #tpu.pipeline_mode<synchronous>, transform_indices = @transform_8, window_bounds = array<i64: 1, 128>}, {transform_indices = @transform_9, window_bounds = array<i64: 128, 128>}]} {
    %c0 = arith.constant 0 : index
    %c0_0 = arith.constant 0 : index
    %0 = vector.load %arg1[%c0, %c0_0] : memref<128x128xbf16, #tpu.memory_space<vmem>>, vector<128x128xbf16>
    %c0_1 = arith.constant 0 : index
    %c0_2 = arith.constant 0 : index
    %1 = vector.load %arg2[%c0_1, %c0_2] : memref<128x256xbf16, #tpu.memory_space<vmem>>, vector<128x256xbf16>
    %cst = arith.constant dense<0.000000e+00> : vector<128x256xf32>
    %2 = tpu.matmul %0, %1, %cst {dimension_numbers = #tpu.dot_dimension_numbers<[1], [0], [0], [1], [0, 0, 1, 1], [], []>} : vector<128x128xbf16>, vector<128x256xbf16>, vector<128x256xf32> -> vector<128x256xf32>
    %c0_3 = arith.constant 0 : index
    %c0_4 = arith.constant 0 : index
    %3 = vector.load %arg3[%c0_3, %c0_4] : memref<1x256xf32, #tpu.memory_space<vmem>>, vector<1x256xf32>
    %4 = vector.broadcast %3 : vector<1x256xf32> to vector<128x256xf32>
    %5 = arith.addf %2, %4 : vector<128x256xf32>
    %cst_5 = arith.constant 0.000000e+00 : f32
    %6 = vector.broadcast %cst_5 : f32 to vector<128x256xf32>
    %7 = arith.maximumf %5, %6 : vector<128x256xf32>
    %8 = arith.truncf %7 : vector<128x256xf32> to vector<128x256xbf16>
    %c0_6 = arith.constant 0 : index
    %c0_7 = arith.constant 0 : index
    %9 = vector.load %arg4[%c0_6, %c0_7] : memref<256x512xbf16, #tpu.memory_space<vmem>>, vector<256x512xbf16>
    %cst_8 = arith.constant dense<0.000000e+00> : vector<128x512xf32>
    %10 = tpu.matmul %8, %9, %cst_8 {dimension_numbers = #tpu.dot_dimension_numbers<[1], [0], [0], [1], [0, 0, 1, 1], [], []>} : vector<128x256xbf16>, vector<256x512xbf16>, vector<128x512xf32> -> vector<128x512xf32>
    %c0_9 = arith.constant 0 : index
    %c0_10 = arith.constant 0 : index
    %11 = vector.load %arg5[%c0_9, %c0_10] : memref<1x512xf32, #tpu.memory_space<vmem>>, vector<1x512xf32>
    %12 = vector.broadcast %11 : vector<1x512xf32> to vector<128x512xf32>
    %13 = arith.addf %10, %12 : vector<128x512xf32>
    %cst_11 = arith.constant 0.000000e+00 : f32
    %14 = vector.broadcast %cst_11 : f32 to vector<128x512xf32>
    %15 = arith.maximumf %13, %14 : vector<128x512xf32>
    %16 = arith.truncf %15 : vector<128x512xf32> to vector<128x512xbf16>
    %c0_12 = arith.constant 0 : index
    %c0_13 = arith.constant 0 : index
    %17 = vector.load %arg6[%c0_12, %c0_13] : memref<512x256xbf16, #tpu.memory_space<vmem>>, vector<512x256xbf16>
    %cst_14 = arith.constant dense<0.000000e+00> : vector<128x256xf32>
    %18 = tpu.matmul %16, %17, %cst_14 {dimension_numbers = #tpu.dot_dimension_numbers<[1], [0], [0], [1], [0, 0, 1, 1], [], []>} : vector<128x512xbf16>, vector<512x256xbf16>, vector<128x256xf32> -> vector<128x256xf32>
    %c0_15 = arith.constant 0 : index
    %c0_16 = arith.constant 0 : index
    %19 = vector.load %arg7[%c0_15, %c0_16] : memref<1x256xf32, #tpu.memory_space<vmem>>, vector<1x256xf32>
    %20 = vector.broadcast %19 : vector<1x256xf32> to vector<128x256xf32>
    %21 = arith.addf %18, %20 : vector<128x256xf32>
    %cst_17 = arith.constant 0.000000e+00 : f32
    %22 = vector.broadcast %cst_17 : f32 to vector<128x256xf32>
    %23 = arith.maximumf %21, %22 : vector<128x256xf32>
    %24 = arith.truncf %23 : vector<128x256xf32> to vector<128x256xbf16>
    %c0_18 = arith.constant 0 : index
    %c0_19 = arith.constant 0 : index
    %25 = vector.load %arg8[%c0_18, %c0_19] : memref<256x128xbf16, #tpu.memory_space<vmem>>, vector<256x128xbf16>
    %cst_20 = arith.constant dense<0.000000e+00> : vector<128x128xf32>
    %26 = tpu.matmul %24, %25, %cst_20 {dimension_numbers = #tpu.dot_dimension_numbers<[1], [0], [0], [1], [0, 0, 1, 1], [], []>} : vector<128x256xbf16>, vector<256x128xbf16>, vector<128x128xf32> -> vector<128x128xf32>
    %c0_21 = arith.constant 0 : index
    %c0_22 = arith.constant 0 : index
    %27 = vector.load %arg9[%c0_21, %c0_22] : memref<1x128xf32, #tpu.memory_space<vmem>>, vector<1x128xf32>
    %28 = vector.broadcast %27 : vector<1x128xf32> to vector<128x128xf32>
    %29 = arith.addf %26, %28 : vector<128x128xf32>
    %c0_23 = arith.constant 0 : index
    %c0_24 = arith.constant 0 : index
    %30 = vector.load %arg10[%c0_23, %c0_24] : memref<128x128xf32, #tpu.memory_space<vmem>>, vector<128x128xf32>
    tpu.vector_store %arg10[%c0_23, %c0_24], %29 {strides = array<i32>} : memref<128x128xf32, #tpu.memory_space<vmem>>, vector<128x128xf32>,
    return
  }
  func.func @transform_0(%arg0: i32) -> (i32, i32) {
    %c0_i32 = arith.constant 0 : i32
    %c0_i32_0 = arith.constant 0 : i32
    return %arg0, %c0_i32 : i32, i32
  }
  func.func @transform_1(%arg0: i32) -> (i32, i32) {
    %c0_i32 = arith.constant 0 : i32
    %c0_i32_0 = arith.constant 0 : i32
    %c0_i32_1 = arith.constant 0 : i32
    return %c0_i32, %c0_i32_0 : i32, i32
  }
  func.func @transform_2(%arg0: i32) -> (i32, i32) {
    %c0_i32 = arith.constant 0 : i32
    %c0_i32_0 = arith.constant 0 : i32
    %c0_i32_1 = arith.constant 0 : i32
    return %c0_i32, %c0_i32_0 : i32, i32
  }
  func.func @transform_3(%arg0: i32) -> (i32, i32) {
    %c0_i32 = arith.constant 0 : i32
    %c0_i32_0 = arith.constant 0 : i32
    %c0_i32_1 = arith.constant 0 : i32
    return %c0_i32, %c0_i32_0 : i32, i32
  }
  func.func @transform_4(%arg0: i32) -> (i32, i32) {
    %c0_i32 = arith.constant 0 : i32
    %c0_i32_0 = arith.constant 0 : i32
    %c0_i32_1 = arith.constant 0 : i32
    return %c0_i32, %c0_i32_0 : i32, i32
  }
  func.func @transform_5(%arg0: i32) -> (i32, i32) {
    %c0_i32 = arith.constant 0 : i32
    %c0_i32_0 = arith.constant 0 : i32
    %c0_i32_1 = arith.constant 0 : i32
    return %c0_i32, %c0_i32_0 : i32, i32
  }
  func.func @transform_6(%arg0: i32) -> (i32, i32) {
    %c0_i32 = arith.constant 0 : i32
    %c0_i32_0 = arith.constant 0 : i32
    %c0_i32_1 = arith.constant 0 : i32
    return %c0_i32, %c0_i32_0 : i32, i32
  }
  func.func @transform_7(%arg0: i32) -> (i32, i32) {
    %c0_i32 = arith.constant 0 : i32
    %c0_i32_0 = arith.constant 0 : i32
    %c0_i32_1 = arith.constant 0 : i32
    return %c0_i32, %c0_i32_0 : i32, i32
  }
  func.func @transform_8(%arg0: i32) -> (i32, i32) {
    %c0_i32 = arith.constant 0 : i32
    %c0_i32_0 = arith.constant 0 : i32
    %c0_i32_1 = arith.constant 0 : i32
    return %c0_i32, %c0_i32_0 : i32, i32
  }
  func.func @transform_9(%arg0: i32) -> (i32, i32) {
    %c0_i32 = arith.constant 0 : i32
    %c0_i32_0 = arith.constant 0 : i32
    return %arg0, %c0_i32 : i32, i32
  }
}

</mosaic_0001>

<llo_original>
// kernel: tpu_custom_call.1
$region0: #{tpu_custom_call.1}
  #allocation0 [shape = 'u32[]', space=smem, size = 0x4, offset = 0x4, fixed_abs, tag = 'smem constant byte address 0x4 - core index']
  #allocation1 [shape = 'u32[144,128]{1,0:T(1,128)}', space=vmem, size = 0x12000, scoped, tag = 'internal scratch']
  %s0 = inlined_call_operand.hbm [shape: bf16[128,128], index: 0, kind: input, shape index: {}]
  %s1 = inlined_call_operand.hbm [shape: bf16[128,256], index: 1, kind: input, shape index: {}]
  %s2 = inlined_call_operand.vmem [shape: f32[1,256], index: 2, kind: input, shape index: {}]
  %s3 = inlined_call_operand.hbm [shape: bf16[256,512], index: 3, kind: input, shape index: {}]
  %s4 = inlined_call_operand.vmem [shape: f32[1,512], index: 4, kind: input, shape index: {}]
  %s5 = inlined_call_operand.hbm [shape: bf16[512,256], index: 5, kind: input, shape index: {}]
  %s6 = inlined_call_operand.vmem [shape: f32[1,256], index: 6, kind: input, shape index: {}]
  %s7 = inlined_call_operand.hbm [shape: bf16[256,128], index: 7, kind: input, shape index: {}]
  %s8 = inlined_call_operand.vmem [shape: f32[1,128], index: 8, kind: input, shape index: {}]
  %s9 = inlined_call_operand.hbm [shape: f32[128,128], index: 9, kind: output, shape index: {}]
  %s10 = sld [smem:[#allocation0]]
  $region66: #{tpu_custom_call.1} parent=0
    _
  %s12 = ssub.s32 1, %s10
  %s13 = scalar_select 0, %s12, %s10
  $region1: #{tpu_custom_call.1} parent=0
    #allocation2 [shape = 'u8[32768]{0}', space=vmem, size = 0x8000, scoped, tag = 'input window, operand 0, single buffered']
    #allocation3 [shape = 's32[1]{0}', space=sflag, size = 0x4, scoped, tag = 'scoped memory for tpu_custom_call.1']
    #allocation4 [shape = 's32[1]{0}', space=sflag, size = 0x4, scoped, tag = 'scoped memory for tpu_custom_call.1']
    #allocation5 [shape = 'u8[65536]{0}', space=vmem, size = 0x10000, scoped, tag = 'input window, operand 1, single buffered']
    #allocation6 [shape = 's32[1]{0}', space=sflag, size = 0x4, scoped, tag = 'scoped memory for tpu_custom_call.1']
    #allocation7 [shape = 'u8[262144]{0}', space=vmem, size = 0x40000, scoped, tag = 'input window, operand 3, single buffered']
    #allocation8 [shape = 'u8[262144]{0}', space=vmem, size = 0x40000, scoped, tag = 'input window, operand 5, single buffered']
    #allocation9 [shape = 's32[1]{0}', space=sflag, size = 0x4, scoped, tag = 'scoped memory for tpu_custom_call.1']
    #allocation10 [shape = 'u8[65536]{0}', space=vmem, size = 0x10000, scoped, tag = 'input window, operand 7, single buffered']
    #allocation11 [shape = 'u8[65536]{0}', space=vmem, size = 0x10000, scoped, tag = 'output window, operand 0, single buffered']
    %14 = vsyncpa [#allocation3], 0
    %15 = vsyncpa [#allocation6], 0
    %16 = vsyncpa [#allocation9], 0
    %17 = vsyncpa [#allocation4], 0
    // Predicated region
    $region2: #{tpu_custom_call.1} parent=1 // pred_check
      _
    $region3: #{tpu_custom_call.1} parent=1 // pred_check_branch
      %19 = sbr.rel (0) target = $region5
    $region4: #{tpu_custom_call.1} parent=1 // pred_region
      %s21 = ssub.s32 1024, 1024
      %22 = vsyncadd [#allocation3], %s21
      %s23 = sshll.u32 [#allocation2], 4
      %s24 = int_to_ptr.vmem [resolvable:$true] %s23
      %29 = dma.hbm_to_vmem [thread:$0]  %s0, 1024, %s24, [#allocation3], 64, 64, 4
    $region5: #{tpu_custom_call.1} parent=1 // pred_fallthru
      _
    // Predicated region
    $region6: #{tpu_custom_call.1} parent=1 // pred_check
      _
    $region7: #{tpu_custom_call.1} parent=1 // pred_check_branch
      %31 = sbr.rel (0) target = $region9
    $region8: #{tpu_custom_call.1} parent=1 // pred_region
      %s33 = ssub.s32 2048, 2048
      %34 = vsyncadd [#allocation6], %s33
      %s35 = sshll.u32 [#allocation5], 4
      %s36 = int_to_ptr.vmem [resolvable:$true] %s35
      %41 = dma.hbm_to_vmem [thread:$0]  %s1, 2048, %s36, [#allocation6], 128, 128, 8
    $region9: #{tpu_custom_call.1} parent=1 // pred_fallthru
      _
    // Predicated region
    $region10: #{tpu_custom_call.1} parent=1 // pred_check
      _
    $region11: #{tpu_custom_call.1} parent=1 // pred_check_branch
      %43 = sbr.rel (0) target = $region13
    $region12: #{tpu_custom_call.1} parent=1 // pred_region
      _
    $region13: #{tpu_custom_call.1} parent=1 // pred_fallthru
      _
    // Predicated region
    $region14: #{tpu_custom_call.1} parent=1 // pred_check
      _
    $region15: #{tpu_custom_call.1} parent=1 // pred_check_branch
      %45 = sbr.rel (0) target = $region17
    $region16: #{tpu_custom_call.1} parent=1 // pred_region
      %s47 = ssub.s32 8192, 8192
      %48 = vsyncadd [#allocation6], %s47
      %s49 = sshll.u32 [#allocation7], 4
      %s50 = int_to_ptr.vmem [resolvable:$true] %s49
      %55 = dma.hbm_to_vmem [thread:$0]  %s3, 8192, %s50, [#allocation6], 256, 256, 16
    $region17: #{tpu_custom_call.1} parent=1 // pred_fallthru
      _
    // Predicated region
    $region18: #{tpu_custom_call.1} parent=1 // pred_check
      _
    $region19: #{tpu_custom_call.1} parent=1 // pred_check_branch
      %57 = sbr.rel (0) target = $region21
    $region20: #{tpu_custom_call.1} parent=1 // pred_region
      _
    $region21: #{tpu_custom_call.1} parent=1 // pred_fallthru
      _
    // Predicated region
    $region22: #{tpu_custom_call.1} parent=1 // pred_check
      _
    $region23: #{tpu_custom_call.1} parent=1 // pred_check_branch
      %59 = sbr.rel (0) target = $region25
    $region24: #{tpu_custom_call.1} parent=1 // pred_region
      %s61 = ssub.s32 8192, 8192
      %62 = vsyncadd [#allocation9], %s61
      %s63 = sshll.u32 [#allocation8], 4
      %s64 = int_to_ptr.vmem [resolvable:$true] %s63
      %69 = dma.hbm_to_vmem [thread:$0]  %s5, 8192, %s64, [#allocation9], 128, 128, 8
    $region25: #{tpu_custom_call.1} parent=1 // pred_fallthru
      _
    // Predicated region
    $region26: #{tpu_custom_call.1} parent=1 // pred_check
      _
    $region27: #{tpu_custom_call.1} parent=1 // pred_check_branch
      %71 = sbr.rel (0) target = $region29
    $region28: #{tpu_custom_call.1} parent=1 // pred_region
      _
    $region29: #{tpu_custom_call.1} parent=1 // pred_fallthru
      _
    // Predicated region
    $region30: #{tpu_custom_call.1} parent=1 // pred_check
      _
    $region31: #{tpu_custom_call.1} parent=1 // pred_check_branch
      %73 = sbr.rel (0) target = $region33
    $region32: #{tpu_custom_call.1} parent=1 // pred_region
      %s75 = ssub.s32 2048, 2048
      %76 = vsyncadd [#allocation9], %s75
      %s77 = sshll.u32 [#allocation10], 4
      %s78 = int_to_ptr.vmem [resolvable:$true] %s77
      %83 = dma.hbm_to_vmem [thread:$0]  %s7, 2048, %s78, [#allocation9], 64, 64, 4
    $region33: #{tpu_custom_call.1} parent=1 // pred_fallthru
      _
    // Predicated region
    $region34: #{tpu_custom_call.1} parent=1 // pred_check
      _
    $region35: #{tpu_custom_call.1} parent=1 // pred_check_branch
      %85 = sbr.rel (0) target = $region37
    $region36: #{tpu_custom_call.1} parent=1 // pred_region
      _
    $region37: #{tpu_custom_call.1} parent=1 // pred_fallthru
      _
    // Predicated region
    $region38: #{tpu_custom_call.1} parent=1 // pred_check
      _
    $region39: #{tpu_custom_call.1} parent=1 // pred_check_branch
      %87 = sbr.rel (0) target = $region41
    $region40: #{tpu_custom_call.1} parent=1 // pred_region
      %88 = dma.done [#allocation3], 1024
    $region41: #{tpu_custom_call.1} parent=1 // pred_fallthru
      _
    // Predicated region
    $region42: #{tpu_custom_call.1} parent=1 // pred_check
      _
    $region43: #{tpu_custom_call.1} parent=1 // pred_check_branch
      %90 = sbr.rel (0) target = $region45
    $region44: #{tpu_custom_call.1} parent=1 // pred_region
      %91 = dma.done [#allocation6], 2048
    $region45: #{tpu_custom_call.1} parent=1 // pred_fallthru
      _
    // Predicated region
    $region46: #{tpu_custom_call.1} parent=1 // pred_check
      _
    $region47: #{tpu_custom_call.1} parent=1 // pred_check_branch
      %93 = sbr.rel (0) target = $region49
    $region48: #{tpu_custom_call.1} parent=1 // pred_region
      %94 = dma.done [#allocation6], 8192
    $region49: #{tpu_custom_call.1} parent=1 // pred_fallthru
      _
    // Predicated region
    $region50: #{tpu_custom_call.1} parent=1 // pred_check
      _
    $region51: #{tpu_custom_call.1} parent=1 // pred_check_branch
      %96 = sbr.rel (0) target = $region53
    $region52: #{tpu_custom_call.1} parent=1 // pred_region
      %97 = dma.done [#allocation9], 8192
    $region53: #{tpu_custom_call.1} parent=1 // pred_fallthru
      _
    // Predicated region
    $region54: #{tpu_custom_call.1} parent=1 // pred_check
      _
    $region55: #{tpu_custom_call.1} parent=1 // pred_check_branch
      %99 = sbr.rel (0) target = $region57
    $region56: #{tpu_custom_call.1} parent=1 // pred_region
      %100 = dma.done [#allocation9], 2048
    $region57: #{tpu_custom_call.1} parent=1 // pred_fallthru
      _
    %v102 = vld [vmem:[#allocation2] sm:$0xf]
    %v103 = vld [vmem:[#allocation2 + $0x4] sm:$0xf]
    %v104 = vld [vmem:[#allocation2 + $0x8] sm:$0xf]
    %v105 = vld [vmem:[#allocation2 + $0xc] sm:$0xf]
    %v106 = vld [vmem:[#allocation2 + $0x10] sm:$0xf]
    %v107 = vld [vmem:[#allocation2 + $0x14] sm:$0xf]
    %v108 = vld [vmem:[#allocation2 + $0x18] sm:$0xf]
    %v109 = vld [vmem:[#allocation2 + $0x1c] sm:$0xf]
    %v110 = vld [vmem:[#allocation2 + $0x20] sm:$0xf]
    %v111 = vld [vmem:[#allocation2 + $0x24] sm:$0xf]
    %v112 = vld [vmem:[#allocation2 + $0x28] sm:$0xf]
    %v113 = vld [vmem:[#allocation2 + $0x2c] sm:$0xf]
    %v114 = vld [vmem:[#allocation2 + $0x30] sm:$0xf]
    %v115 = vld [vmem:[#allocation2 + $0x34] sm:$0xf]
    %v116 = vld [vmem:[#allocation2 + $0x38] sm:$0xf]
    %v117 = vld [vmem:[#allocation2 + $0x3c] sm:$0xf]
    %v118 = vld [vmem:[#allocation5] sm:$0xff]
    %v119 = vld [vmem:[#allocation5 + $0x8] sm:$0xff]
    %v120 = vld [vmem:[#allocation5 + $0x10] sm:$0xff]
    %v121 = vld [vmem:[#allocation5 + $0x18] sm:$0xff]
    %v122 = vld [vmem:[#allocation5 + $0x20] sm:$0xff]
    %v123 = vld [vmem:[#allocation5 + $0x28] sm:$0xff]
    %v124 = vld [vmem:[#allocation5 + $0x30] sm:$0xff]
    %v125 = vld [vmem:[#allocation5 + $0x38] sm:$0xff]
    %v126 = vld [vmem:[#allocation5 + $0x40] sm:$0xff]
    %v127 = vld [vmem:[#allocation5 + $0x48] sm:$0xff]
    %v128 = vld [vmem:[#allocation5 + $0x50] sm:$0xff]
    %v129 = vld [vmem:[#allocation5 + $0x58] sm:$0xff]
    %v130 = vld [vmem:[#allocation5 + $0x60] sm:$0xff]
    %v131 = vld [vmem:[#allocation5 + $0x68] sm:$0xff]
    %v132 = vld [vmem:[#allocation5 + $0x70] sm:$0xff]
    %v133 = vld [vmem:[#allocation5 + $0x78] sm:$0xff]
    %v134 = vld [vmem:[%s2] sm:$0x3]
    %v136 = vlaneseq
    %v137 = vshrl.u32 %v136, 7
    %v138 = vsub.s32 0, %v137
    %v139 = vrot.slane %v134, %v138
    %v140 = vlaneseq
    %v141 = vshrl.u32 %v140, 7
    %v142 = vsub.s32 1, %v141
    %v143 = vrot.slane %v134, %v142
    %v162 = vunpack.c.l.b16 %v102
    %v163 = vunpack.c.l.b16 %v103
    %v164 = vunpack.c.l.b16 %v104
    %v165 = vunpack.c.l.b16 %v105
    %v166 = vunpack.c.l.b16 %v106
    %v167 = vunpack.c.l.b16 %v107
    %v168 = vunpack.c.l.b16 %v108
    %v169 = vunpack.c.l.b16 %v109
    %v170 = vunpack.c.l.b16 %v110
    %v171 = vunpack.c.l.b16 %v111
    %v172 = vunpack.c.l.b16 %v112
    %v173 = vunpack.c.l.b16 %v113
    %v174 = vunpack.c.l.b16 %v114
    %v175 = vunpack.c.l.b16 %v115
    %v176 = vunpack.c.l.b16 %v116
    %v177 = vunpack.c.l.b16 %v117
    %v178 = vpack.c.b16 %v163, %v162
    %v179 = vpack.c.b16 %v165, %v164
    %v180 = vpack.c.b16 %v167, %v166
    %v181 = vpack.c.b16 %v169, %v168
    %v182 = vpack.c.b16 %v171, %v170
    %v183 = vpack.c.b16 %v173, %v172
    %v184 = vpack.c.b16 %v175, %v174
    %v185 = vpack.c.b16 %v177, %v176
    %v210 = vunpack.c.l.b16 %v118
    %v211 = vunpack.c.h.b16 %v118
    %v212 = vunpack.c.l.b16 %v119
    %v213 = vunpack.c.h.b16 %v119
    %v214 = vunpack.c.l.b16 %v120
    %v215 = vunpack.c.h.b16 %v120
    %v216 = vunpack.c.l.b16 %v121
    %v217 = vunpack.c.h.b16 %v121
    %v218 = vunpack.c.l.b16 %v122
    %v219 = vunpack.c.h.b16 %v122
    %v220 = vunpack.c.l.b16 %v123
    %v221 = vunpack.c.h.b16 %v123
    %v222 = vunpack.c.l.b16 %v124
    %v223 = vunpack.c.h.b16 %v124
    %v224 = vunpack.c.l.b16 %v125
    %v225 = vunpack.c.h.b16 %v125
    %v226 = vunpack.c.l.b16 %v126
    %v227 = vunpack.c.h.b16 %v126
    %v228 = vunpack.c.l.b16 %v127
    %v229 = vunpack.c.h.b16 %v127
    %v230 = vunpack.c.l.b16 %v128
    %v231 = vunpack.c.h.b16 %v128
    %v232 = vunpack.c.l.b16 %v129
    %v233 = vunpack.c.h.b16 %v129
    %v234 = vunpack.c.l.b16 %v130
    %v235 = vunpack.c.h.b16 %v130
    %v236 = vunpack.c.l.b16 %v131
    %v237 = vunpack.c.h.b16 %v131
    %v238 = vunpack.c.l.b16 %v132
    %v239 = vunpack.c.h.b16 %v132
    %v240 = vunpack.c.l.b16 %v133
    %v241 = vunpack.c.h.b16 %v133
    %v242 = vpack.c.b16 %v212, %v210
    %v243 = vpack.c.b16 %v213, %v211
    %v244 = vpack.c.b16 %v216, %v214
    %v245 = vpack.c.b16 %v217, %v215
    %v246 = vpack.c.b16 %v220, %v218
    %v247 = vpack.c.b16 %v221, %v219
    %v248 = vpack.c.b16 %v224, %v222
    %v249 = vpack.c.b16 %v225, %v223
    %v250 = vpack.c.b16 %v228, %v226
    %v251 = vpack.c.b16 %v229, %v227
    %v252 = vpack.c.b16 %v232, %v230
    %v253 = vpack.c.b16 %v233, %v231
    %v254 = vpack.c.b16 %v236, %v234
    %v255 = vpack.c.b16 %v237, %v235
    %v256 = vpack.c.b16 %v240, %v238
    %v257 = vpack.c.b16 %v241, %v239
    %274 = vmatprep.subr.bf16.mxu0 %v243
    %275 = vmatpush1.bf16.msra.mxu0 %v242
    %276 = vmatprep.subr.bf16.mxu0 %v245
    %277 = vmatpush1.bf16.msra.mxu0 %v244
    %278 = vmatprep.subr.bf16.mxu0 %v247
    %279 = vmatpush1.bf16.msra.mxu0 %v246
    %280 = vmatprep.subr.bf16.mxu0 %v249
    %281 = vmatpush1.bf16.msra.mxu0 %v248
    %282 = vmatprep.subr.bf16.mxu0 %v251
    %283 = vmatpush1.bf16.msra.mxu0 %v250
    %284 = vmatprep.subr.bf16.mxu0 %v253
    %285 = vmatpush1.bf16.msra.mxu0 %v252
    %286 = vmatprep.subr.bf16.mxu0 %v255
    %287 = vmatpush1.bf16.msra.mxu0 %v254
    %288 = vmatprep.subr.bf16.mxu0 %v257
    %289 = vmatpush1.bf16.msra.mxu0 %v256
    %290 = vmatprep.subr.bf16.mxu0 0
    %291 = vmatpush1.bf16.msra.mxu0 0
    %292 = vmatprep.subr.bf16.mxu0 0
    %293 = vmatpush1.bf16.msra.mxu0 0
    %294 = vmatprep.subr.bf16.mxu0 0
    %295 = vmatpush1.bf16.msra.mxu0 0
    %296 = vmatprep.subr.bf16.mxu0 0
    %297 = vmatpush1.bf16.msra.mxu0 0
    %298 = vmatprep.subr.bf16.mxu0 0
    %299 = vmatpush1.bf16.msra.mxu0 0
    %300 = vmatprep.subr.bf16.mxu0 0
    %301 = vmatpush1.bf16.msra.mxu0 0
    %302 = vmatprep.subr.bf16.mxu0 0
    %303 = vmatpush1.bf16.msra.mxu0 0
    %304 = vmatprep.subr.bf16.mxu0 0
    %305 = vmatpush1.bf16.msra.mxu0 0
    %306 = vmatprep.mubr.bf16.mxu0 0
    %307 = vmatmul.mubr.bf16.gmra.mrb[0].mxu0 %v178
    %v308 = vpop.f32.mrb[0].mxu0
    %v309 = vadd.f32 %v139, %v308
    %v310 = vpop.f32.mrb[0].mxu0
    %v311 = vadd.f32 %v143, %v310
    %v312 = vpop.f32.mrb[0].mxu0
    %v313 = vadd.f32 %v139, %v312
    %v314 = vpop.f32.mrb[0].mxu0
    %v315 = vadd.f32 %v143, %v314
    %316 = vmatprep.mubr.bf16.mxu0 0
    %317 = vmatmul.mubr.bf16.gmra.mrb[0].mxu0 %v179
    %v318 = vpop.f32.mrb[0].mxu0
    %v319 = vadd.f32 %v139, %v318
    %v320 = vpop.f32.mrb[0].mxu0
    %v321 = vadd.f32 %v143, %v320
    %v322 = vpop.f32.mrb[0].mxu0
    %v323 = vadd.f32 %v139, %v322
    %v324 = vpop.f32.mrb[0].mxu0
    %v325 = vadd.f32 %v143, %v324
    %326 = vmatprep.mubr.bf16.mxu0 0
    %327 = vmatmul.mubr.bf16.gmra.mrb[0].mxu0 %v180
    %v328 = vpop.f32.mrb[0].mxu0
    %v329 = vadd.f32 %v139, %v328
    %v330 = vpop.f32.mrb[0].mxu0
    %v331 = vadd.f32 %v143, %v330
    %v332 = vpop.f32.mrb[0].mxu0
    %v333 = vadd.f32 %v139, %v332
    %v334 = vpop.f32.mrb[0].mxu0
    %v335 = vadd.f32 %v143, %v334
    %336 = vmatprep.mubr.bf16.mxu0 0
    %337 = vmatmul.mubr.bf16.gmra.mrb[0].mxu0 %v181
    %v338 = vpop.f32.mrb[0].mxu0
    %v339 = vadd.f32 %v139, %v338
    %v340 = vpop.f32.mrb[0].mxu0
    %v341 = vadd.f32 %v143, %v340
    %v342 = vpop.f32.mrb[0].mxu0
    %v343 = vadd.f32 %v139, %v342
    %v344 = vpop.f32.mrb[0].mxu0
    %v345 = vadd.f32 %v143, %v344
    %346 = vmatprep.mubr.bf16.mxu0 0
    %347 = vmatmul.mubr.bf16.gmra.mrb[0].mxu0 %v182
    %v348 = vpop.f32.mrb[0].mxu0
    %v349 = vadd.f32 %v139, %v348
    %v350 = vpop.f32.mrb[0].mxu0
    %v351 = vadd.f32 %v143, %v350
    %v352 = vpop.f32.mrb[0].mxu0
    %v353 = vadd.f32 %v139, %v352
    %v354 = vpop.f32.mrb[0].mxu0
    %v355 = vadd.f32 %v143, %v354
    %356 = vmatprep.mubr.bf16.mxu0 0
    %357 = vmatmul.mubr.bf16.gmra.mrb[0].mxu0 %v183
    %v358 = vpop.f32.mrb[0].mxu0
    %v359 = vadd.f32 %v139, %v358
    %v360 = vpop.f32.mrb[0].mxu0
    %v361 = vadd.f32 %v143, %v360
    %v362 = vpop.f32.mrb[0].mxu0
    %v363 = vadd.f32 %v139, %v362
    %v364 = vpop.f32.mrb[0].mxu0
    %v365 = vadd.f32 %v143, %v364
    %366 = vmatprep.mubr.bf16.mxu0 0
    %367 = vmatmul.mubr.bf16.gmra.mrb[0].mxu0 %v184
    %v368 = vpop.f32.mrb[0].mxu0
    %v369 = vadd.f32 %v139, %v368
    %v370 = vpop.f32.mrb[0].mxu0
    %v371 = vadd.f32 %v143, %v370
    %v372 = vpop.f32.mrb[0].mxu0
    %v373 = vadd.f32 %v139, %v372
    %v374 = vpop.f32.mrb[0].mxu0
    %v375 = vadd.f32 %v143, %v374
    %376 = vmatprep.mubr.bf16.mxu0 0
    %377 = vmatmul.mubr.bf16.gmra.mrb[0].mxu0 %v185
    %v378 = vpop.f32.mrb[0].mxu0
    %v379 = vadd.f32 %v139, %v378
    %v380 = vpop.f32.mrb[0].mxu0
    %v381 = vadd.f32 %v143, %v380
    %v382 = vpop.f32.mrb[0].mxu0
    %v383 = vadd.f32 %v139, %v382
    %v384 = vpop.f32.mrb[0].mxu0
    %v385 = vadd.f32 %v143, %v384
    %386 = vdwg.mxu0
    %v387 = vmax.f32 %v309, 0.0
    %v388 = vmax.f32 %v311, 0.0
    %v389 = vmax.f32 %v313, 0.0
    %v390 = vmax.f32 %v315, 0.0
    %v391 = vmax.f32 %v319, 0.0
    %v392 = vmax.f32 %v321, 0.0
    %v393 = vmax.f32 %v323, 0.0
    %v394 = vmax.f32 %v325, 0.0
    %v395 = vmax.f32 %v329, 0.0
    %v396 = vmax.f32 %v331, 0.0
    %v397 = vmax.f32 %v333, 0.0
    %v398 = vmax.f32 %v335, 0.0
    %v399 = vmax.f32 %v339, 0.0
    %v400 = vmax.f32 %v341, 0.0
    %v401 = vmax.f32 %v343, 0.0
    %v402 = vmax.f32 %v345, 0.0
    %v403 = vmax.f32 %v349, 0.0
    %v404 = vmax.f32 %v351, 0.0
    %v405 = vmax.f32 %v353, 0.0
    %v406 = vmax.f32 %v355, 0.0
    %v407 = vmax.f32 %v359, 0.0
    %v408 = vmax.f32 %v361, 0.0
    %v409 = vmax.f32 %v363, 0.0
    %v410 = vmax.f32 %v365, 0.0
    %v411 = vmax.f32 %v369, 0.0
    %v412 = vmax.f32 %v371, 0.0
    %v413 = vmax.f32 %v373, 0.0
    %v414 = vmax.f32 %v375, 0.0
    %v415 = vmax.f32 %v379, 0.0
    %v416 = vmax.f32 %v381, 0.0
    %v417 = vmax.f32 %v383, 0.0
    %v418 = vmax.f32 %v385, 0.0
    %v419 = vpack.c.bf16 %v389, %v387
    %v420 = vpack.c.bf16 %v390, %v388
    %v421 = vpack.c.bf16 %v393, %v391
    %v422 = vpack.c.bf16 %v394, %v392
    %v423 = vpack.c.bf16 %v397, %v395
    %v424 = vpack.c.bf16 %v398, %v396
    %v425 = vpack.c.bf16 %v401, %v399
    %v426 = vpack.c.bf16 %v402, %v400
    %v427 = vpack.c.bf16 %v405, %v403
    %v428 = vpack.c.bf16 %v406, %v404
    %v429 = vpack.c.bf16 %v409, %v407
    %v430 = vpack.c.bf16 %v410, %v408
    %v431 = vpack.c.bf16 %v413, %v411
    %v432 = vpack.c.bf16 %v414, %v412
    %v433 = vpack.c.bf16 %v417, %v415
    %v434 = vpack.c.bf16 %v418, %v416
    %v435 = vld [vmem:[#allocation7] sm:$0xff]
    %v436 = vld [vmem:[#allocation7 + $0x8] sm:$0xff]
    %v437 = vld [vmem:[#allocation7 + $0x10] sm:$0xff]
    %v438 = vld [vmem:[#allocation7 + $0x18] sm:$0xff]
    %v439 = vld [vmem:[#allocation7 + $0x20] sm:$0xff]
    %v440 = vld [vmem:[#allocation7 + $0x28] sm:$0xff]
    %v441 = vld [vmem:[#allocation7 + $0x30] sm:$0xff]
    %v442 = vld [vmem:[#allocation7 + $0x38] sm:$0xff]
    %v443 = vld [vmem:[#allocation7 + $0x40] sm:$0xff]
    %v444 = vld [vmem:[#allocation7 + $0x48] sm:$0xff]
    %v445 = vld [vmem:[#allocation7 + $0x50] sm:$0xff]
    %v446 = vld [vmem:[#allocation7 + $0x58] sm:$0xff]
    %v447 = vld [vmem:[#allocation7 + $0x60] sm:$0xff]
    %v448 = vld [vmem:[#allocation7 + $0x68] sm:$0xff]
    %v449 = vld [vmem:[#allocation7 + $0x70] sm:$0xff]
    %v450 = vld [vmem:[#allocation7 + $0x78] sm:$0xff]
    %v451 = vld [vmem:[#allocation7 + $0x80] sm:$0xff]
    %v452 = vld [vmem:[#allocation7 + $0x88] sm:$0xff]
    %v453 = vld [vmem:[#allocation7 + $0x90] sm:$0xff]
    %v454 = vld [vmem:[#allocation7 + $0x98] sm:$0xff]
    %v455 = vld [vmem:[#allocation7 + $0xa0] sm:$0xff]
    %v456 = vld [vmem:[#allocation7 + $0xa8] sm:$0xff]
    %v457 = vld [vmem:[#allocation7 + $0xb0] sm:$0xff]
    %v458 = vld [vmem:[#allocation7 + $0xb8] sm:$0xff]
    %v459 = vld [vmem:[#allocation7 + $0xc0] sm:$0xff]
    %v460 = vld [vmem:[#allocation7 + $0xc8] sm:$0xff]
    %v461 = vld [vmem:[#allocation7 + $0xd0] sm:$0xff]
    %v462 = vld [vmem:[#allocation7 + $0xd8] sm:$0xff]
    %v463 = vld [vmem:[#allocation7 + $0xe0] sm:$0xff]
    %v464 = vld [vmem:[#allocation7 + $0xe8] sm:$0xff]
    %v465 = vld [vmem:[#allocation7 + $0xf0] sm:$0xff]
    %v466 = vld [vmem:[#allocation7 + $0xf8] sm:$0xff]
    %v467 = vld [vmem:[#allocation7 + $0x100] sm:$0xff]
    %v468 = vld [vmem:[#allocation7 + $0x108] sm:$0xff]
    %v469 = vld [vmem:[#allocation7 + $0x110] sm:$0xff]
    %v470 = vld [vmem:[#allocation7 + $0x118] sm:$0xff]
    %v471 = vld [vmem:[#allocation7 + $0x120] sm:$0xff]
    %v472 = vld [vmem:[#allocation7 + $0x128] sm:$0xff]
    %v473 = vld [vmem:[#allocation7 + $0x130] sm:$0xff]
    %v474 = vld [vmem:[#allocation7 + $0x138] sm:$0xff]
    %v475 = vld [vmem:[#allocation7 + $0x140] sm:$0xff]
    %v476 = vld [vmem:[#allocation7 + $0x148] sm:$0xff]
    %v477 = vld [vmem:[#allocation7 + $0x150] sm:$0xff]
    %v478 = vld [vmem:[#allocation7 + $0x158] sm:$0xff]
    %v479 = vld [vmem:[#allocation7 + $0x160] sm:$0xff]
    %v480 = vld [vmem:[#allocation7 + $0x168] sm:$0xff]
    %v481 = vld [vmem:[#allocation7 + $0x170] sm:$0xff]
    %v482 = vld [vmem:[#allocation7 + $0x178] sm:$0xff]
    %v483 = vld [vmem:[#allocation7 + $0x180] sm:$0xff]
    %v484 = vld [vmem:[#allocation7 + $0x188] sm:$0xff]
    %v485 = vld [vmem:[#allocation7 + $0x190] sm:$0xff]
    %v486 = vld [vmem:[#allocation7 + $0x198] sm:$0xff]
    %v487 = vld [vmem:[#allocation7 + $0x1a0] sm:$0xff]
    %v488 = vld [vmem:[#allocation7 + $0x1a8] sm:$0xff]
    %v489 = vld [vmem:[#allocation7 + $0x1b0] sm:$0xff]
    %v490 = vld [vmem:[#allocation7 + $0x1b8] sm:$0xff]
    %v491 = vld [vmem:[#allocation7 + $0x1c0] sm:$0xff]
    %v492 = vld [vmem:[#allocation7 + $0x1c8] sm:$0xff]
    %v493 = vld [vmem:[#allocation7 + $0x1d0] sm:$0xff]
    %v494 = vld [vmem:[#allocation7 + $0x1d8] sm:$0xff]
    %v495 = vld [vmem:[#allocation7 + $0x1e0] sm:$0xff]
    %v496 = vld [vmem:[#allocation7 + $0x1e8] sm:$0xff]
    %v497 = vld [vmem:[#allocation7 + $0x1f0] sm:$0xff]
    %v498 = vld [vmem:[#allocation7 + $0x1f8] sm:$0xff]
    %v499 = vld [vmem:[%s4] sm:$0xf]
    %v501 = vlaneseq
    %v502 = vshrl.u32 %v501, 7
    %v503 = vsub.s32 0, %v502
    %v504 = vrot.slane %v499, %v503
    %v505 = vlaneseq
    %v506 = vshrl.u32 %v505, 7
    %v507 = vsub.s32 1, %v506
    %v508 = vrot.slane %v499, %v507
    %v509 = vlaneseq
    %v510 = vshrl.u32 %v509, 7
    %v511 = vsub.s32 2, %v510
    %v512 = vrot.slane %v499, %v511
    %v513 = vlaneseq
    %v514 = vshrl.u32 %v513, 7
    %v515 = vsub.s32 3, %v514
    %v516 = vrot.slane %v499, %v515
    %v585 = vunpack.c.l.b16 %v435
    %v586 = vunpack.c.h.b16 %v435
    %v587 = vunpack.c.l.b16 %v436
    %v588 = vunpack.c.h.b16 %v436
    %v589 = vunpack.c.l.b16 %v437
    %v590 = vunpack.c.h.b16 %v437
    %v591 = vunpack.c.l.b16 %v438
    %v592 = vunpack.c.h.b16 %v438
    %v593 = vunpack.c.l.b16 %v439
    %v594 = vunpack.c.h.b16 %v439
    %v595 = vunpack.c.l.b16 %v440
    %v596 = vunpack.c.h.b16 %v440
    %v597 = vunpack.c.l.b16 %v441
    %v598 = vunpack.c.h.b16 %v441
    %v599 = vunpack.c.l.b16 %v442
    %v600 = vunpack.c.h.b16 %v442
    %v601 = vunpack.c.l.b16 %v443
    %v602 = vunpack.c.h.b16 %v443
    %v603 = vunpack.c.l.b16 %v444
    %v604 = vunpack.c.h.b16 %v444
    %v605 = vunpack.c.l.b16 %v445
    %v606 = vunpack.c.h.b16 %v445
    %v607 = vunpack.c.l.b16 %v446
    %v608 = vunpack.c.h.b16 %v446
    %v609 = vunpack.c.l.b16 %v447
    %v610 = vunpack.c.h.b16 %v447
    %v611 = vunpack.c.l.b16 %v448
    %v612 = vunpack.c.h.b16 %v448
    %v613 = vunpack.c.l.b16 %v449
    %v614 = vunpack.c.h.b16 %v449
    %v615 = vunpack.c.l.b16 %v450
    %v616 = vunpack.c.h.b16 %v450
    %v617 = vunpack.c.l.b16 %v451
    %v618 = vunpack.c.h.b16 %v451
    %v619 = vunpack.c.l.b16 %v452
    %v620 = vunpack.c.h.b16 %v452
    %v621 = vunpack.c.l.b16 %v453
    %v622 = vunpack.c.h.b16 %v453
    %v623 = vunpack.c.l.b16 %v454
    %v624 = vunpack.c.h.b16 %v454
    %v625 = vunpack.c.l.b16 %v455
    %v626 = vunpack.c.h.b16 %v455
    %v627 = vunpack.c.l.b16 %v456
    %v628 = vunpack.c.h.b16 %v456
    %v629 = vunpack.c.l.b16 %v457
    %v630 = vunpack.c.h.b16 %v457
    %v631 = vunpack.c.l.b16 %v458
    %v632 = vunpack.c.h.b16 %v458
    %v633 = vunpack.c.l.b16 %v459
    %v634 = vunpack.c.h.b16 %v459
    %v635 = vunpack.c.l.b16 %v460
    %v636 = vunpack.c.h.b16 %v460
    %v637 = vunpack.c.l.b16 %v461
    %v638 = vunpack.c.h.b16 %v461
    %v639 = vunpack.c.l.b16 %v462
    %v640 = vunpack.c.h.b16 %v462
    %v641 = vunpack.c.l.b16 %v463
    %v642 = vunpack.c.h.b16 %v463
    %v643 = vunpack.c.l.b16 %v464
    %v644 = vunpack.c.h.b16 %v464
    %v645 = vunpack.c.l.b16 %v465
    %v646 = vunpack.c.h.b16 %v465
    %v647 = vunpack.c.l.b16 %v466
    %v648 = vunpack.c.h.b16 %v466
    %v649 = vunpack.c.l.b16 %v467
    %v650 = vunpack.c.h.b16 %v467
    %v651 = vunpack.c.l.b16 %v468
    %v652 = vunpack.c.h.b16 %v468
    %v653 = vunpack.c.l.b16 %v469
    %v654 = vunpack.c.h.b16 %v469
    %v655 = vunpack.c.l.b16 %v470
    %v656 = vunpack.c.h.b16 %v470
    %v657 = vunpack.c.l.b16 %v471
    %v658 = vunpack.c.h.b16 %v471
    %v659 = vunpack.c.l.b16 %v472
    %v660 = vunpack.c.h.b16 %v472
    %v661 = vunpack.c.l.b16 %v473
    %v662 = vunpack.c.h.b16 %v473
    %v663 = vunpack.c.l.b16 %v474
    %v664 = vunpack.c.h.b16 %v474
    %v665 = vunpack.c.l.b16 %v475
    %v666 = vunpack.c.h.b16 %v475
    %v667 = vunpack.c.l.b16 %v476
    %v668 = vunpack.c.h.b16 %v476
    %v669 = vunpack.c.l.b16 %v477
    %v670 = vunpack.c.h.b16 %v477
    %v671 = vunpack.c.l.b16 %v478
    %v672 = vunpack.c.h.b16 %v478
    %v673 = vunpack.c.l.b16 %v479
    %v674 = vunpack.c.h.b16 %v479
    %v675 = vunpack.c.l.b16 %v480
    %v676 = vunpack.c.h.b16 %v480
    %v677 = vunpack.c.l.b16 %v481
    %v678 = vunpack.c.h.b16 %v481
    %v679 = vunpack.c.l.b16 %v482
    %v680 = vunpack.c.h.b16 %v482
    %v681 = vunpack.c.l.b16 %v483
    %v682 = vunpack.c.h.b16 %v483
    %v683 = vunpack.c.l.b16 %v484
    %v684 = vunpack.c.h.b16 %v484
    %v685 = vunpack.c.l.b16 %v485
    %v686 = vunpack.c.h.b16 %v485
    %v687 = vunpack.c.l.b16 %v486
    %v688 = vunpack.c.h.b16 %v486
    %v689 = vunpack.c.l.b16 %v487
    %v690 = vunpack.c.h.b16 %v487
    %v691 = vunpack.c.l.b16 %v488
    %v692 = vunpack.c.h.b16 %v488
    %v693 = vunpack.c.l.b16 %v489
    %v694 = vunpack.c.h.b16 %v489
    %v695 = vunpack.c.l.b16 %v490
    %v696 = vunpack.c.h.b16 %v490
    %v697 = vunpack.c.l.b16 %v491
    %v698 = vunpack.c.h.b16 %v491
    %v699 = vunpack.c.l.b16 %v492
    %v700 = vunpack.c.h.b16 %v492
    %v701 = vunpack.c.l.b16 %v493
    %v702 = vunpack.c.h.b16 %v493
    %v703 = vunpack.c.l.b16 %v494
    %v704 = vunpack.c.h.b16 %v494
    %v705 = vunpack.c.l.b16 %v495
    %v706 = vunpack.c.h.b16 %v495
    %v707 = vunpack.c.l.b16 %v496
    %v708 = vunpack.c.h.b16 %v496
    %v709 = vunpack.c.l.b16 %v497
    %v710 = vunpack.c.h.b16 %v497
    %v711 = vunpack.c.l.b16 %v498
    %v712 = vunpack.c.h.b16 %v498
    %v713 = vpack.c.b16 %v589, %v585
    %v714 = vpack.c.b16 %v590, %v586
    %v715 = vpack.c.b16 %v591, %v587
    %v716 = vpack.c.b16 %v592, %v588
    %v717 = vpack.c.b16 %v597, %v593
    %v718 = vpack.c.b16 %v598, %v594
    %v719 = vpack.c.b16 %v599, %v595
    %v720 = vpack.c.b16 %v600, %v596
    %v721 = vpack.c.b16 %v605, %v601
    %v722 = vpack.c.b16 %v606, %v602
    %v723 = vpack.c.b16 %v607, %v603
    %v724 = vpack.c.b16 %v608, %v604
    %v725 = vpack.c.b16 %v613, %v609
    %v726 = vpack.c.b16 %v614, %v610
    %v727 = vpack.c.b16 %v615, %v611
    %v728 = vpack.c.b16 %v616, %v612
    %v729 = vpack.c.b16 %v621, %v617
    %v730 = vpack.c.b16 %v622, %v618
    %v731 = vpack.c.b16 %v623, %v619
    %v732 = vpack.c.b16 %v624, %v620
    %v733 = vpack.c.b16 %v629, %v625
    %v734 = vpack.c.b16 %v630, %v626
    %v735 = vpack.c.b16 %v631, %v627
    %v736 = vpack.c.b16 %v632, %v628
    %v737 = vpack.c.b16 %v637, %v633
    %v738 = vpack.c.b16 %v638, %v634
    %v739 = vpack.c.b16 %v639, %v635
    %v740 = vpack.c.b16 %v640, %v636
    %v741 = vpack.c.b16 %v645, %v641
    %v742 = vpack.c.b16 %v646, %v642
    %v743 = vpack.c.b16 %v647, %v643
    %v744 = vpack.c.b16 %v648, %v644
    %v745 = vpack.c.b16 %v653, %v649
    %v746 = vpack.c.b16 %v654, %v650
    %v747 = vpack.c.b16 %v655, %v651
    %v748 = vpack.c.b16 %v656, %v652
    %v749 = vpack.c.b16 %v661, %v657
    %v750 = vpack.c.b16 %v662, %v658
    %v751 = vpack.c.b16 %v663, %v659
    %v752 = vpack.c.b16 %v664, %v660
    %v753 = vpack.c.b16 %v669, %v665
    %v754 = vpack.c.b16 %v670, %v666
    %v755 = vpack.c.b16 %v671, %v667
    %v756 = vpack.c.b16 %v672, %v668
    %v757 = vpack.c.b16 %v677, %v673
    %v758 = vpack.c.b16 %v678, %v674
    %v759 = vpack.c.b16 %v679, %v675
    %v760 = vpack.c.b16 %v680, %v676
    %v761 = vpack.c.b16 %v685, %v681
    %v762 = vpack.c.b16 %v686, %v682
    %v763 = vpack.c.b16 %v687, %v683
    %v764 = vpack.c.b16 %v688, %v684
    %v765 = vpack.c.b16 %v693, %v689
    %v766 = vpack.c.b16 %v694, %v690
    %v767 = vpack.c.b16 %v695, %v691
    %v768 = vpack.c.b16 %v696, %v692
    %v769 = vpack.c.b16 %v701, %v697
    %v770 = vpack.c.b16 %v702, %v698
    %v771 = vpack.c.b16 %v703, %v699
    %v772 = vpack.c.b16 %v704, %v700
    %v773 = vpack.c.b16 %v709, %v705
    %v774 = vpack.c.b16 %v710, %v706
    %v775 = vpack.c.b16 %v711, %v707
    %v776 = vpack.c.b16 %v712, %v708
    %841 = vmatprep.subr.bf16.mxu0 %v714
    %842 = vmatpush1.bf16.msra.mxu0 %v713
    %843 = vmatprep.subr.bf16.mxu0 %v718
    %844 = vmatpush1.bf16.msra.mxu0 %v717
    %845 = vmatprep.subr.bf16.mxu0 %v722
    %846 = vmatpush1.bf16.msra.mxu0 %v721
    %847 = vmatprep.subr.bf16.mxu0 %v726
    %848 = vmatpush1.bf16.msra.mxu0 %v725
    %849 = vmatprep.subr.bf16.mxu0 %v730
    %850 = vmatpush1.bf16.msra.mxu0 %v729
    %851 = vmatprep.subr.bf16.mxu0 %v734
    %852 = vmatpush1.bf16.msra.mxu0 %v733
    %853 = vmatprep.subr.bf16.mxu0 %v738
    %854 = vmatpush1.bf16.msra.mxu0 %v737
    %855 = vmatprep.subr.bf16.mxu0 %v742
    %856 = vmatpush1.bf16.msra.mxu0 %v741
    %857 = vmatprep.subr.bf16.mxu0 %v746
    %858 = vmatpush1.bf16.msra.mxu0 %v745
    %859 = vmatprep.subr.bf16.mxu0 %v750
    %860 = vmatpush1.bf16.msra.mxu0 %v749
    %861 = vmatprep.subr.bf16.mxu0 %v754
    %862 = vmatpush1.bf16.msra.mxu0 %v753
    %863 = vmatprep.subr.bf16.mxu0 %v758
    %864 = vmatpush1.bf16.msra.mxu0 %v757
    %865 = vmatprep.subr.bf16.mxu0 %v762
    %866 = vmatpush1.bf16.msra.mxu0 %v761
    %867 = vmatprep.subr.bf16.mxu0 %v766
    %868 = vmatpush1.bf16.msra.mxu0 %v765
    %869 = vmatprep.subr.bf16.mxu0 %v770
    %870 = vmatpush1.bf16.msra.mxu0 %v769
    %871 = vmatprep.subr.bf16.mxu0 %v774
    %872 = vmatpush1.bf16.msra.mxu0 %v773
    %873 = vmatprep.mubr.bf16.mxu0 %v420
    %874 = vmatmul.mubr.bf16.gmra.mrb[0].mxu0 %v419
    %v875 = vpop.f32.mrb[0].mxu0
    %v876 = vadd.f32 %v504, %v875
    %v877 = vpop.f32.mrb[0].mxu0
    %v878 = vadd.f32 %v508, %v877
    %v879 = vpop.f32.mrb[0].mxu0
    %v880 = vadd.f32 %v504, %v879
    %v881 = vpop.f32.mrb[0].mxu0
    %v882 = vadd.f32 %v508, %v881
    %883 = vmatprep.mubr.bf16.mxu0 %v422
    %884 = vmatmul.mubr.bf16.gmra.mrb[0].mxu0 %v421
    %v885 = vpop.f32.mrb[0].mxu0
    %v886 = vadd.f32 %v504, %v885
    %v887 = vpop.f32.mrb[0].mxu0
    %v888 = vadd.f32 %v508, %v887
    %v889 = vpop.f32.mrb[0].mxu0
    %v890 = vadd.f32 %v504, %v889
    %v891 = vpop.f32.mrb[0].mxu0
    %v892 = vadd.f32 %v508, %v891
    %893 = vmatprep.mubr.bf16.mxu0 %v424
    %894 = vmatmul.mubr.bf16.gmra.mrb[0].mxu0 %v423
    %v895 = vpop.f32.mrb[0].mxu0
    %v896 = vadd.f32 %v504, %v895
    %v897 = vpop.f32.mrb[0].mxu0
    %v898 = vadd.f32 %v508, %v897
    %v899 = vpop.f32.mrb[0].mxu0
    %v900 = vadd.f32 %v504, %v899
    %v901 = vpop.f32.mrb[0].mxu0
    %v902 = vadd.f32 %v508, %v901
    %903 = vmatprep.mubr.bf16.mxu0 %v426
    %904 = vmatmul.mubr.bf16.gmra.mrb[0].mxu0 %v425
    %v905 = vpop.f32.mrb[0].mxu0
    %v906 = vadd.f32 %v504, %v905
    %v907 = vpop.f32.mrb[0].mxu0
    %v908 = vadd.f32 %v508, %v907
    %v909 = vpop.f32.mrb[0].mxu0
    %v910 = vadd.f32 %v504, %v909
    %v911 = vpop.f32.mrb[0].mxu0
    %v912 = vadd.f32 %v508, %v911
    %913 = vmatprep.mubr.bf16.mxu0 %v428
    %914 = vmatmul.mubr.bf16.gmra.mrb[0].mxu0 %v427
    %v915 = vpop.f32.mrb[0].mxu0
    %v916 = vadd.f32 %v504, %v915
    %v917 = vpop.f32.mrb[0].mxu0
    %v918 = vadd.f32 %v508, %v917
    %v919 = vpop.f32.mrb[0].mxu0
    %v920 = vadd.f32 %v504, %v919
    %v921 = vpop.f32.mrb[0].mxu0
    %v922 = vadd.f32 %v508, %v921
    %923 = vmatprep.mubr.bf16.mxu0 %v430
    %924 = vmatmul.mubr.bf16.gmra.mrb[0].mxu0 %v429
    %v925 = vpop.f32.mrb[0].mxu0
    %v926 = vadd.f32 %v504, %v925
    %v927 = vpop.f32.mrb[0].mxu0
    %v928 = vadd.f32 %v508, %v927
    %v929 = vpop.f32.mrb[0].mxu0
    %v930 = vadd.f32 %v504, %v929
    %v931 = vpop.f32.mrb[0].mxu0
    %v932 = vadd.f32 %v508, %v931
    %933 = vmatprep.mubr.bf16.mxu0 %v432
    %934 = vmatmul.mubr.bf16.gmra.mrb[0].mxu0 %v431
    %v935 = vpop.f32.mrb[0].mxu0
    %v936 = vadd.f32 %v504, %v935
    %v937 = vpop.f32.mrb[0].mxu0
    %v938 = vadd.f32 %v508, %v937
    %v939 = vpop.f32.mrb[0].mxu0
    %v940 = vadd.f32 %v504, %v939
    %v941 = vpop.f32.mrb[0].mxu0
    %v942 = vadd.f32 %v508, %v941
    %943 = vmatprep.mubr.bf16.mxu0 %v434
    %944 = vmatmul.mubr.bf16.gmra.mrb[0].mxu0 %v433
    %v945 = vpop.f32.mrb[0].mxu0
    %v946 = vadd.f32 %v504, %v945
    %v947 = vpop.f32.mrb[0].mxu0
    %v948 = vadd.f32 %v508, %v947
    %v949 = vpop.f32.mrb[0].mxu0
    %v950 = vadd.f32 %v504, %v949
    %v951 = vpop.f32.mrb[0].mxu0
    %v952 = vadd.f32 %v508, %v951
    %953 = vdwg.mxu0
    %954 = vmatprep.subr.bf16.mxu0 %v716
    %955 = vmatpush1.bf16.msra.mxu0 %v715
    %956 = vmatprep.subr.bf16.mxu0 %v720
    %957 = vmatpush1.bf16.msra.mxu0 %v719
    %958 = vmatprep.subr.bf16.mxu0 %v724
    %959 = vmatpush1.bf16.msra.mxu0 %v723
    %960 = vmatprep.subr.bf16.mxu0 %v728
    %961 = vmatpush1.bf16.msra.mxu0 %v727
    %962 = vmatprep.subr.bf16.mxu0 %v732
    %963 = vmatpush1.bf16.msra.mxu0 %v731
    %964 = vmatprep.subr.bf16.mxu0 %v736
    %965 = vmatpush1.bf16.msra.mxu0 %v735
    %966 = vmatprep.subr.bf16.mxu0 %v740
    %967 = vmatpush1.bf16.msra.mxu0 %v739
    %968 = vmatprep.subr.bf16.mxu0 %v744
    %969 = vmatpush1.bf16.msra.mxu0 %v743
    %970 = vmatprep.subr.bf16.mxu0 %v748
    %971 = vmatpush1.bf16.msra.mxu0 %v747
    %972 = vmatprep.subr.bf16.mxu0 %v752
    %973 = vmatpush1.bf16.msra.mxu0 %v751
    %974 = vmatprep.subr.bf16.mxu0 %v756
    %975 = vmatpush1.bf16.msra.mxu0 %v755
    %976 = vmatprep.subr.bf16.mxu0 %v760
    %977 = vmatpush1.bf16.msra.mxu0 %v759
    %978 = vmatprep.subr.bf16.mxu0 %v764
    %979 = vmatpush1.bf16.msra.mxu0 %v763
    %980 = vmatprep.subr.bf16.mxu0 %v768
    %981 = vmatpush1.bf16.msra.mxu0 %v767
    %982 = vmatprep.subr.bf16.mxu0 %v772
    %983 = vmatpush1.bf16.msra.mxu0 %v771
    %984 = vmatprep.subr.bf16.mxu0 %v776
    %985 = vmatpush1.bf16.msra.mxu0 %v775
    %986 = vmatprep.mubr.bf16.mxu0 %v420
    %987 = vmatmul.mubr.bf16.gmra.mrb[0].mxu0 %v419
    %v988 = vpop.f32.mrb[0].mxu0
    %v989 = vadd.f32 %v512, %v988
    %v990 = vpop.f32.mrb[0].mxu0
    %v991 = vadd.f32 %v516, %v990
    %v992 = vpop.f32.mrb[0].mxu0
    %v993 = vadd.f32 %v512, %v992
    %v994 = vpop.f32.mrb[0].mxu0
    %v995 = vadd.f32 %v516, %v994
    %996 = vmatprep.mubr.bf16.mxu0 %v422
    %997 = vmatmul.mubr.bf16.gmra.mrb[0].mxu0 %v421
    %v998 = vpop.f32.mrb[0].mxu0
    %v999 = vadd.f32 %v512, %v998
    %v1000 = vpop.f32.mrb[0].mxu0
    %v1001 = vadd.f32 %v516, %v1000
    %v1002 = vpop.f32.mrb[0].mxu0
    %v1003 = vadd.f32 %v512, %v1002
    %v1004 = vpop.f32.mrb[0].mxu0
    %v1005 = vadd.f32 %v516, %v1004
    %1006 = vmatprep.mubr.bf16.mxu0 %v424
    %1007 = vmatmul.mubr.bf16.gmra.mrb[0].mxu0 %v423
    %v1008 = vpop.f32.mrb[0].mxu0
    %v1009 = vadd.f32 %v512, %v1008
    %v1010 = vpop.f32.mrb[0].mxu0
    %v1011 = vadd.f32 %v516, %v1010
    %v1012 = vpop.f32.mrb[0].mxu0
    %v1013 = vadd.f32 %v512, %v1012
    %v1014 = vpop.f32.mrb[0].mxu0
    %v1015 = vadd.f32 %v516, %v1014
    %1016 = vmatprep.mubr.bf16.mxu0 %v426
    %1017 = vmatmul.mubr.bf16.gmra.mrb[0].mxu0 %v425
    %v1018 = vpop.f32.mrb[0].mxu0
    %v1019 = vadd.f32 %v512, %v1018
    %v1020 = vpop.f32.mrb[0].mxu0
    %v1021 = vadd.f32 %v516, %v1020
    %v1022 = vpop.f32.mrb[0].mxu0
    %v1023 = vadd.f32 %v512, %v1022
    %v1024 = vpop.f32.mrb[0].mxu0
    %v1025 = vadd.f32 %v516, %v1024
    %1026 = vmatprep.mubr.bf16.mxu0 %v428
    %1027 = vmatmul.mubr.bf16.gmra.mrb[0].mxu0 %v427
    %v1028 = vpop.f32.mrb[0].mxu0
    %v1029 = vadd.f32 %v512, %v1028
    %v1030 = vpop.f32.mrb[0].mxu0
    %v1031 = vadd.f32 %v516, %v1030
    %v1032 = vpop.f32.mrb[0].mxu0
    %v1033 = vadd.f32 %v512, %v1032
    %v1034 = vpop.f32.mrb[0].mxu0
    %v1035 = vadd.f32 %v516, %v1034
    %1036 = vmatprep.mubr.bf16.mxu0 %v430
    %1037 = vmatmul.mubr.bf16.gmra.mrb[0].mxu0 %v429
    %v1038 = vpop.f32.mrb[0].mxu0
    %v1039 = vadd.f32 %v512, %v1038
    %v1040 = vpop.f32.mrb[0].mxu0
    %v1041 = vadd.f32 %v516, %v1040
    %v1042 = vpop.f32.mrb[0].mxu0
    %v1043 = vadd.f32 %v512, %v1042
    %v1044 = vpop.f32.mrb[0].mxu0
    %v1045 = vadd.f32 %v516, %v1044
    %1046 = vmatprep.mubr.bf16.mxu0 %v432
    %1047 = vmatmul.mubr.bf16.gmra.mrb[0].mxu0 %v431
    %v1048 = vpop.f32.mrb[0].mxu0
    %v1049 = vadd.f32 %v512, %v1048
    %v1050 = vpop.f32.mrb[0].mxu0
    %v1051 = vadd.f32 %v516, %v1050
    %v1052 = vpop.f32.mrb[0].mxu0
    %v1053 = vadd.f32 %v512, %v1052
    %v1054 = vpop.f32.mrb[0].mxu0
    %v1055 = vadd.f32 %v516, %v1054
    %1056 = vmatprep.mubr.bf16.mxu0 %v434
    %1057 = vmatmul.mubr.bf16.gmra.mrb[0].mxu0 %v433
    %v1058 = vpop.f32.mrb[0].mxu0
    %v1059 = vadd.f32 %v512, %v1058
    %v1060 = vpop.f32.mrb[0].mxu0
    %v1061 = vadd.f32 %v516, %v1060
    %v1062 = vpop.f32.mrb[0].mxu0
    %v1063 = vadd.f32 %v512, %v1062
    %v1064 = vpop.f32.mrb[0].mxu0
    %v1065 = vadd.f32 %v516, %v1064
    %1066 = vdwg.mxu0
    %v1067 = vmax.f32 %v876, 0.0
    %v1068 = vmax.f32 %v878, 0.0
    %v1069 = vmax.f32 %v989, 0.0
    %v1070 = vmax.f32 %v991, 0.0
    %v1071 = vmax.f32 %v880, 0.0
    %v1072 = vmax.f32 %v882, 0.0
    %v1073 = vmax.f32 %v993, 0.0
    %v1074 = vmax.f32 %v995, 0.0
    %v1075 = vmax.f32 %v886, 0.0
    %v1076 = vmax.f32 %v888, 0.0
    %v1077 = vmax.f32 %v999, 0.0
    %v1078 = vmax.f32 %v1001, 0.0
    %v1079 = vmax.f32 %v890, 0.0
    %v1080 = vmax.f32 %v892, 0.0
    %v1081 = vmax.f32 %v1003, 0.0
    %v1082 = vmax.f32 %v1005, 0.0
    %v1083 = vmax.f32 %v896, 0.0
    %v1084 = vmax.f32 %v898, 0.0
    %v1085 = vmax.f32 %v1009, 0.0
    %v1086 = vmax.f32 %v1011, 0.0
    %v1087 = vmax.f32 %v900, 0.0
    %v1088 = vmax.f32 %v902, 0.0
    %v1089 = vmax.f32 %v1013, 0.0
    %v1090 = vmax.f32 %v1015, 0.0
    %v1091 = vmax.f32 %v906, 0.0
    %v1092 = vmax.f32 %v908, 0.0
    %v1093 = vmax.f32 %v1019, 0.0
    %v1094 = vmax.f32 %v1021, 0.0
    %v1095 = vmax.f32 %v910, 0.0
    %v1096 = vmax.f32 %v912, 0.0
    %v1097 = vmax.f32 %v1023, 0.0
    %v1098 = vmax.f32 %v1025, 0.0
    %v1099 = vmax.f32 %v916, 0.0
    %v1100 = vmax.f32 %v918, 0.0
    %v1101 = vmax.f32 %v1029, 0.0
    %v1102 = vmax.f32 %v1031, 0.0
    %v1103 = vmax.f32 %v920, 0.0
    %v1104 = vmax.f32 %v922, 0.0
    %v1105 = vmax.f32 %v1033, 0.0
    %v1106 = vmax.f32 %v1035, 0.0
    %v1107 = vmax.f32 %v926, 0.0
    %v1108 = vmax.f32 %v928, 0.0
    %v1109 = vmax.f32 %v1039, 0.0
    %v1110 = vmax.f32 %v1041, 0.0
    %v1111 = vmax.f32 %v930, 0.0
    %v1112 = vmax.f32 %v932, 0.0
    %v1113 = vmax.f32 %v1043, 0.0
    %v1114 = vmax.f32 %v1045, 0.0
    %v1115 = vmax.f32 %v936, 0.0
    %v1116 = vmax.f32 %v938, 0.0
    %v1117 = vmax.f32 %v1049, 0.0
    %v1118 = vmax.f32 %v1051, 0.0
    %v1119 = vmax.f32 %v940, 0.0
    %v1120 = vmax.f32 %v942, 0.0
    %v1121 = vmax.f32 %v1053, 0.0
    %v1122 = vmax.f32 %v1055, 0.0
    %v1123 = vmax.f32 %v946, 0.0
    %v1124 = vmax.f32 %v948, 0.0
    %v1125 = vmax.f32 %v1059, 0.0
    %v1126 = vmax.f32 %v1061, 0.0
    %v1127 = vmax.f32 %v950, 0.0
    %v1128 = vmax.f32 %v952, 0.0
    %v1129 = vmax.f32 %v1063, 0.0
    %v1130 = vmax.f32 %v1065, 0.0
    %v1131 = vpack.c.bf16 %v1071, %v1067
    %v1132 = vpack.c.bf16 %v1072, %v1068
    %v1133 = vpack.c.bf16 %v1073, %v1069
    %v1134 = vpack.c.bf16 %v1074, %v1070
    %v1135 = vpack.c.bf16 %v1079, %v1075
    %v1136 = vpack.c.bf16 %v1080, %v1076
    %v1137 = vpack.c.bf16 %v1081, %v1077
    %v1138 = vpack.c.bf16 %v1082, %v1078
    %v1139 = vpack.c.bf16 %v1087, %v1083
    %v1140 = vpack.c.bf16 %v1088, %v1084
    %v1141 = vpack.c.bf16 %v1089, %v1085
    %v1142 = vpack.c.bf16 %v1090, %v1086
    %v1143 = vpack.c.bf16 %v1095, %v1091
    %v1144 = vpack.c.bf16 %v1096, %v1092
    %v1145 = vpack.c.bf16 %v1097, %v1093
    %v1146 = vpack.c.bf16 %v1098, %v1094
    %v1147 = vpack.c.bf16 %v1103, %v1099
    %v1148 = vpack.c.bf16 %v1104, %v1100
    %v1149 = vpack.c.bf16 %v1105, %v1101
    %v1150 = vpack.c.bf16 %v1106, %v1102
    %v1151 = vpack.c.bf16 %v1111, %v1107
    %v1152 = vpack.c.bf16 %v1112, %v1108
    %v1153 = vpack.c.bf16 %v1113, %v1109
    %v1154 = vpack.c.bf16 %v1114, %v1110
    %v1155 = vpack.c.bf16 %v1119, %v1115
    %v1156 = vpack.c.bf16 %v1120, %v1116
    %v1157 = vpack.c.bf16 %v1121, %v1117
    %v1158 = vpack.c.bf16 %v1122, %v1118
    %v1159 = vpack.c.bf16 %v1127, %v1123
    %v1160 = vpack.c.bf16 %v1128, %v1124
    %v1161 = vpack.c.bf16 %v1129, %v1125
    %v1162 = vpack.c.bf16 %v1130, %v1126
    %v1163 = vld [vmem:[#allocation8] sm:$0xff]
    %v1164 = vld [vmem:[#allocation8 + $0x8] sm:$0xff]
    %v1165 = vld [vmem:[#allocation8 + $0x10] sm:$0xff]
    %v1166 = vld [vmem:[#allocation8 + $0x18] sm:$0xff]
    %v1167 = vld [vmem:[#allocation8 + $0x20] sm:$0xff]
    %v1168 = vld [vmem:[#allocation8 + $0x28] sm:$0xff]
    %v1169 = vld [vmem:[#allocation8 + $0x30] sm:$0xff]
    %v1170 = vld [vmem:[#allocation8 + $0x38] sm:$0xff]
    %v1171 = vld [vmem:[#allocation8 + $0x40] sm:$0xff]
    %v1172 = vld [vmem:[#allocation8 + $0x48] sm:$0xff]
    %v1173 = vld [vmem:[#allocation8 + $0x50] sm:$0xff]
    %v1174 = vld [vmem:[#allocation8 + $0x58] sm:$0xff]
    %v1175 = vld [vmem:[#allocation8 + $0x60] sm:$0xff]
    %v1176 = vld [vmem:[#allocation8 + $0x68] sm:$0xff]
    %v1177 = vld [vmem:[#allocation8 + $0x70] sm:$0xff]
    %v1178 = vld [vmem:[#allocation8 + $0x78] sm:$0xff]
    %v1179 = vld [vmem:[#allocation8 + $0x80] sm:$0xff]
    %v1180 = vld [vmem:[#allocation8 + $0x88] sm:$0xff]
    %v1181 = vld [vmem:[#allocation8 + $0x90] sm:$0xff]
    %v1182 = vld [vmem:[#allocation8 + $0x98] sm:$0xff]
    %v1183 = vld [vmem:[#allocation8 + $0xa0] sm:$0xff]
    %v1184 = vld [vmem:[#allocation8 + $0xa8] sm:$0xff]
    %v1185 = vld [vmem:[#allocation8 + $0xb0] sm:$0xff]
    %v1186 = vld [vmem:[#allocation8 + $0xb8] sm:$0xff]
    %v1187 = vld [vmem:[#allocation8 + $0xc0] sm:$0xff]
    %v1188 = vld [vmem:[#allocation8 + $0xc8] sm:$0xff]
    %v1189 = vld [vmem:[#allocation8 + $0xd0] sm:$0xff]
    %v1190 = vld [vmem:[#allocation8 + $0xd8] sm:$0xff]
    %v1191 = vld [vmem:[#allocation8 + $0xe0] sm:$0xff]
    %v1192 = vld [vmem:[#allocation8 + $0xe8] sm:$0xff]
    %v1193 = vld [vmem:[#allocation8 + $0xf0] sm:$0xff]
    %v1194 = vld [vmem:[#allocation8 + $0xf8] sm:$0xff]
    %v1195 = vld [vmem:[#allocation8 + $0x100] sm:$0xff]
    %v1196 = vld [vmem:[#allocation8 + $0x108] sm:$0xff]
    %v1197 = vld [vmem:[#allocation8 + $0x110] sm:$0xff]
    %v1198 = vld [vmem:[#allocation8 + $0x118] sm:$0xff]
    %v1199 = vld [vmem:[#allocation8 + $0x120] sm:$0xff]
    %v1200 = vld [vmem:[#allocation8 + $0x128] sm:$0xff]
    %v1201 = vld [vmem:[#allocation8 + $0x130] sm:$0xff]
    %v1202 = vld [vmem:[#allocation8 + $0x138] sm:$0xff]
    %v1203 = vld [vmem:[#allocation8 + $0x140] sm:$0xff]
    %v1204 = vld [vmem:[#allocation8 + $0x148] sm:$0xff]
    %v1205 = vld [vmem:[#allocation8 + $0x150] sm:$0xff]
    %v1206 = vld [vmem:[#allocation8 + $0x158] sm:$0xff]
    %v1207 = vld [vmem:[#allocation8 + $0x160] sm:$0xff]
    %v1208 = vld [vmem:[#allocation8 + $0x168] sm:$0xff]
    %v1209 = vld [vmem:[#allocation8 + $0x170] sm:$0xff]
    %v1210 = vld [vmem:[#allocation8 + $0x178] sm:$0xff]
    %v1211 = vld [vmem:[#allocation8 + $0x180] sm:$0xff]
    %v1212 = vld [vmem:[#allocation8 + $0x188] sm:$0xff]
    %v1213 = vld [vmem:[#allocation8 + $0x190] sm:$0xff]
    %v1214 = vld [vmem:[#allocation8 + $0x198] sm:$0xff]
    %v1215 = vld [vmem:[#allocation8 + $0x1a0] sm:$0xff]
    %v1216 = vld [vmem:[#allocation8 + $0x1a8] sm:$0xff]
    %v1217 = vld [vmem:[#allocation8 + $0x1b0] sm:$0xff]
    %v1218 = vld [vmem:[#allocation8 + $0x1b8] sm:$0xff]
    %v1219 = vld [vmem:[#allocation8 + $0x1c0] sm:$0xff]
    %v1220 = vld [vmem:[#allocation8 + $0x1c8] sm:$0xff]
    %v1221 = vld [vmem:[#allocation8 + $0x1d0] sm:$0xff]
    %v1222 = vld [vmem:[#allocation8 + $0x1d8] sm:$0xff]
    %v1223 = vld [vmem:[#allocation8 + $0x1e0] sm:$0xff]
    %v1224 = vld [vmem:[#allocation8 + $0x1e8] sm:$0xff]
    %v1225 = vld [vmem:[#allocation8 + $0x1f0] sm:$0xff]
    %v1226 = vld [vmem:[#allocation8 + $0x1f8] sm:$0xff]
    %v1227 = vld [vmem:[%s6] sm:$0x3]
    %v1229 = vlaneseq
    %v1230 = vshrl.u32 %v1229, 7
    %v1231 = vsub.s32 0, %v1230
    %v1232 = vrot.slane %v1227, %v1231
    %v1233 = vlaneseq
    %v1234 = vshrl.u32 %v1233, 7
    %v1235 = vsub.s32 1, %v1234
    %v1236 = vrot.slane %v1227, %v1235
    %v1303 = vunpack.c.l.b16 %v1163
    %v1304 = vunpack.c.h.b16 %v1163
    %v1305 = vunpack.c.l.b16 %v1164
    %v1306 = vunpack.c.h.b16 %v1164
    %v1307 = vunpack.c.l.b16 %v1165
    %v1308 = vunpack.c.h.b16 %v1165
    %v1309 = vunpack.c.l.b16 %v1166
    %v1310 = vunpack.c.h.b16 %v1166
    %v1311 = vunpack.c.l.b16 %v1167
    %v1312 = vunpack.c.h.b16 %v1167
    %v1313 = vunpack.c.l.b16 %v1168
    %v1314 = vunpack.c.h.b16 %v1168
    %v1315 = vunpack.c.l.b16 %v1169
    %v1316 = vunpack.c.h.b16 %v1169
    %v1317 = vunpack.c.l.b16 %v1170
    %v1318 = vunpack.c.h.b16 %v1170
    %v1319 = vunpack.c.l.b16 %v1171
    %v1320 = vunpack.c.h.b16 %v1171
    %v1321 = vunpack.c.l.b16 %v1172
    %v1322 = vunpack.c.h.b16 %v1172
    %v1323 = vunpack.c.l.b16 %v1173
    %v1324 = vunpack.c.h.b16 %v1173
    %v1325 = vunpack.c.l.b16 %v1174
    %v1326 = vunpack.c.h.b16 %v1174
    %v1327 = vunpack.c.l.b16 %v1175
    %v1328 = vunpack.c.h.b16 %v1175
    %v1329 = vunpack.c.l.b16 %v1176
    %v1330 = vunpack.c.h.b16 %v1176
    %v1331 = vunpack.c.l.b16 %v1177
    %v1332 = vunpack.c.h.b16 %v1177
    %v1333 = vunpack.c.l.b16 %v1178
    %v1334 = vunpack.c.h.b16 %v1178
    %v1335 = vunpack.c.l.b16 %v1179
    %v1336 = vunpack.c.h.b16 %v1179
    %v1337 = vunpack.c.l.b16 %v1180
    %v1338 = vunpack.c.h.b16 %v1180
    %v1339 = vunpack.c.l.b16 %v1181
    %v1340 = vunpack.c.h.b16 %v1181
    %v1341 = vunpack.c.l.b16 %v1182
    %v1342 = vunpack.c.h.b16 %v1182
    %v1343 = vunpack.c.l.b16 %v1183
    %v1344 = vunpack.c.h.b16 %v1183
    %v1345 = vunpack.c.l.b16 %v1184
    %v1346 = vunpack.c.h.b16 %v1184
    %v1347 = vunpack.c.l.b16 %v1185
    %v1348 = vunpack.c.h.b16 %v1185
    %v1349 = vunpack.c.l.b16 %v1186
    %v1350 = vunpack.c.h.b16 %v1186
    %v1351 = vunpack.c.l.b16 %v1187
    %v1352 = vunpack.c.h.b16 %v1187
    %v1353 = vunpack.c.l.b16 %v1188
    %v1354 = vunpack.c.h.b16 %v1188
    %v1355 = vunpack.c.l.b16 %v1189
    %v1356 = vunpack.c.h.b16 %v1189
    %v1357 = vunpack.c.l.b16 %v1190
    %v1358 = vunpack.c.h.b16 %v1190
    %v1359 = vunpack.c.l.b16 %v1191
    %v1360 = vunpack.c.h.b16 %v1191
    %v1361 = vunpack.c.l.b16 %v1192
    %v1362 = vunpack.c.h.b16 %v1192
    %v1363 = vunpack.c.l.b16 %v1193
    %v1364 = vunpack.c.h.b16 %v1193
    %v1365 = vunpack.c.l.b16 %v1194
    %v1366 = vunpack.c.h.b16 %v1194
    %v1367 = vunpack.c.l.b16 %v1195
    %v1368 = vunpack.c.h.b16 %v1195
    %v1369 = vunpack.c.l.b16 %v1196
    %v1370 = vunpack.c.h.b16 %v1196
    %v1371 = vunpack.c.l.b16 %v1197
    %v1372 = vunpack.c.h.b16 %v1197
    %v1373 = vunpack.c.l.b16 %v1198
    %v1374 = vunpack.c.h.b16 %v1198
    %v1375 = vunpack.c.l.b16 %v1199
    %v1376 = vunpack.c.h.b16 %v1199
    %v1377 = vunpack.c.l.b16 %v1200
    %v1378 = vunpack.c.h.b16 %v1200
    %v1379 = vunpack.c.l.b16 %v1201
    %v1380 = vunpack.c.h.b16 %v1201
    %v1381 = vunpack.c.l.b16 %v1202
    %v1382 = vunpack.c.h.b16 %v1202
    %v1383 = vunpack.c.l.b16 %v1203
    %v1384 = vunpack.c.h.b16 %v1203
    %v1385 = vunpack.c.l.b16 %v1204
    %v1386 = vunpack.c.h.b16 %v1204
    %v1387 = vunpack.c.l.b16 %v1205
    %v1388 = vunpack.c.h.b16 %v1205
    %v1389 = vunpack.c.l.b16 %v1206
    %v1390 = vunpack.c.h.b16 %v1206
    %v1391 = vunpack.c.l.b16 %v1207
    %v1392 = vunpack.c.h.b16 %v1207
    %v1393 = vunpack.c.l.b16 %v1208
    %v1394 = vunpack.c.h.b16 %v1208
    %v1395 = vunpack.c.l.b16 %v1209
    %v1396 = vunpack.c.h.b16 %v1209
    %v1397 = vunpack.c.l.b16 %v1210
    %v1398 = vunpack.c.h.b16 %v1210
    %v1399 = vunpack.c.l.b16 %v1211
    %v1400 = vunpack.c.h.b16 %v1211
    %v1401 = vunpack.c.l.b16 %v1212
    %v1402 = vunpack.c.h.b16 %v1212
    %v1403 = vunpack.c.l.b16 %v1213
    %v1404 = vunpack.c.h.b16 %v1213
    %v1405 = vunpack.c.l.b16 %v1214
    %v1406 = vunpack.c.h.b16 %v1214
    %v1407 = vunpack.c.l.b16 %v1215
    %v1408 = vunpack.c.h.b16 %v1215
    %v1409 = vunpack.c.l.b16 %v1216
    %v1410 = vunpack.c.h.b16 %v1216
    %v1411 = vunpack.c.l.b16 %v1217
    %v1412 = vunpack.c.h.b16 %v1217
    %v1413 = vunpack.c.l.b16 %v1218
    %v1414 = vunpack.c.h.b16 %v1218
    %v1415 = vunpack.c.l.b16 %v1219
    %v1416 = vunpack.c.h.b16 %v1219
    %v1417 = vunpack.c.l.b16 %v1220
    %v1418 = vunpack.c.h.b16 %v1220
    %v1419 = vunpack.c.l.b16 %v1221
    %v1420 = vunpack.c.h.b16 %v1221
    %v1421 = vunpack.c.l.b16 %v1222
    %v1422 = vunpack.c.h.b16 %v1222
    %v1423 = vunpack.c.l.b16 %v1223
    %v1424 = vunpack.c.h.b16 %v1223
    %v1425 = vunpack.c.l.b16 %v1224
    %v1426 = vunpack.c.h.b16 %v1224
    %v1427 = vunpack.c.l.b16 %v1225
    %v1428 = vunpack.c.h.b16 %v1225
    %v1429 = vunpack.c.l.b16 %v1226
    %v1430 = vunpack.c.h.b16 %v1226
    %v1431 = vpack.c.b16 %v1305, %v1303
    %v1432 = vpack.c.b16 %v1306, %v1304
    %v1433 = vpack.c.b16 %v1309, %v1307
    %v1434 = vpack.c.b16 %v1310, %v1308
    %v1435 = vpack.c.b16 %v1313, %v1311
    %v1436 = vpack.c.b16 %v1314, %v1312
    %v1437 = vpack.c.b16 %v1317, %v1315
    %v1438 = vpack.c.b16 %v1318, %v1316
    %v1439 = vpack.c.b16 %v1321, %v1319
    %v1440 = vpack.c.b16 %v1322, %v1320
    %v1441 = vpack.c.b16 %v1325, %v1323
    %v1442 = vpack.c.b16 %v1326, %v1324
    %v1443 = vpack.c.b16 %v1329, %v1327
    %v1444 = vpack.c.b16 %v1330, %v1328
    %v1445 = vpack.c.b16 %v1333, %v1331
    %v1446 = vpack.c.b16 %v1334, %v1332
    %v1447 = vpack.c.b16 %v1337, %v1335
    %v1448 = vpack.c.b16 %v1338, %v1336
    %v1449 = vpack.c.b16 %v1341, %v1339
    %v1450 = vpack.c.b16 %v1342, %v1340
    %v1451 = vpack.c.b16 %v1345, %v1343
    %v1452 = vpack.c.b16 %v1346, %v1344
    %v1453 = vpack.c.b16 %v1349, %v1347
    %v1454 = vpack.c.b16 %v1350, %v1348
    %v1455 = vpack.c.b16 %v1353, %v1351
    %v1456 = vpack.c.b16 %v1354, %v1352
    %v1457 = vpack.c.b16 %v1357, %v1355
    %v1458 = vpack.c.b16 %v1358, %v1356
    %v1459 = vpack.c.b16 %v1361, %v1359
    %v1460 = vpack.c.b16 %v1362, %v1360
    %v1461 = vpack.c.b16 %v1365, %v1363
    %v1462 = vpack.c.b16 %v1366, %v1364
    %v1463 = vpack.c.b16 %v1369, %v1367
    %v1464 = vpack.c.b16 %v1370, %v1368
    %v1465 = vpack.c.b16 %v1373, %v1371
    %v1466 = vpack.c.b16 %v1374, %v1372
    %v1467 = vpack.c.b16 %v1377, %v1375
    %v1468 = vpack.c.b16 %v1378, %v1376
    %v1469 = vpack.c.b16 %v1381, %v1379
    %v1470 = vpack.c.b16 %v1382, %v1380
    %v1471 = vpack.c.b16 %v1385, %v1383
    %v1472 = vpack.c.b16 %v1386, %v1384
    %v1473 = vpack.c.b16 %v1389, %v1387
    %v1474 = vpack.c.b16 %v1390, %v1388
    %v1475 = vpack.c.b16 %v1393, %v1391
    %v1476 = vpack.c.b16 %v1394, %v1392
    %v1477 = vpack.c.b16 %v1397, %v1395
    %v1478 = vpack.c.b16 %v1398, %v1396
    %v1479 = vpack.c.b16 %v1401, %v1399
    %v1480 = vpack.c.b16 %v1402, %v1400
    %v1481 = vpack.c.b16 %v1405, %v1403
    %v1482 = vpack.c.b16 %v1406, %v1404
    %v1483 = vpack.c.b16 %v1409, %v1407
    %v1484 = vpack.c.b16 %v1410, %v1408
    %v1485 = vpack.c.b16 %v1413, %v1411
    %v1486 = vpack.c.b16 %v1414, %v1412
    %v1487 = vpack.c.b16 %v1417, %v1415
    %v1488 = vpack.c.b16 %v1418, %v1416
    %v1489 = vpack.c.b16 %v1421, %v1419
    %v1490 = vpack.c.b16 %v1422, %v1420
    %v1491 = vpack.c.b16 %v1425, %v1423
    %v1492 = vpack.c.b16 %v1426, %v1424
    %v1493 = vpack.c.b16 %v1429, %v1427
    %v1494 = vpack.c.b16 %v1430, %v1428
    %1559 = vmatprep.subr.bf16.mxu0 %v1432
    %1560 = vmatpush1.bf16.msra.mxu0 %v1431
    %1561 = vmatprep.subr.bf16.mxu0 %v1434
    %1562 = vmatpush1.bf16.msra.mxu0 %v1433
    %1563 = vmatprep.subr.bf16.mxu0 %v1436
    %1564 = vmatpush1.bf16.msra.mxu0 %v1435
    %1565 = vmatprep.subr.bf16.mxu0 %v1438
    %1566 = vmatpush1.bf16.msra.mxu0 %v1437
    %1567 = vmatprep.subr.bf16.mxu0 %v1440
    %1568 = vmatpush1.bf16.msra.mxu0 %v1439
    %1569 = vmatprep.subr.bf16.mxu0 %v1442
    %1570 = vmatpush1.bf16.msra.mxu0 %v1441
    %1571 = vmatprep.subr.bf16.mxu0 %v1444
    %1572 = vmatpush1.bf16.msra.mxu0 %v1443
    %1573 = vmatprep.subr.bf16.mxu0 %v1446
    %1574 = vmatpush1.bf16.msra.mxu0 %v1445
    %1575 = vmatprep.subr.bf16.mxu0 %v1448
    %1576 = vmatpush1.bf16.msra.mxu0 %v1447
    %1577 = vmatprep.subr.bf16.mxu0 %v1450
    %1578 = vmatpush1.bf16.msra.mxu0 %v1449
    %1579 = vmatprep.subr.bf16.mxu0 %v1452
    %1580 = vmatpush1.bf16.msra.mxu0 %v1451
    %1581 = vmatprep.subr.bf16.mxu0 %v1454
    %1582 = vmatpush1.bf16.msra.mxu0 %v1453
    %1583 = vmatprep.subr.bf16.mxu0 %v1456
    %1584 = vmatpush1.bf16.msra.mxu0 %v1455
    %1585 = vmatprep.subr.bf16.mxu0 %v1458
    %1586 = vmatpush1.bf16.msra.mxu0 %v1457
    %1587 = vmatprep.subr.bf16.mxu0 %v1460
    %1588 = vmatpush1.bf16.msra.mxu0 %v1459
    %1589 = vmatprep.subr.bf16.mxu0 %v1462
    %1590 = vmatpush1.bf16.msra.mxu0 %v1461
    %1591 = vmatprep.mubr.bf16.mxu0 %v1132
    %1592 = vmatmul.mubr.bf16.gmra.mrb[0].mxu0 %v1131
    %v1593 = vpop.f32.mrb[0].mxu0
    %v1594 = vadd.f32 %v1232, %v1593
    %v1595 = vpop.f32.mrb[0].mxu0
    %v1596 = vadd.f32 %v1236, %v1595
    %v1597 = vpop.f32.mrb[0].mxu0
    %v1598 = vadd.f32 %v1232, %v1597
    %v1599 = vpop.f32.mrb[0].mxu0
    %v1600 = vadd.f32 %v1236, %v1599
    %1601 = vmatprep.mubr.bf16.mxu0 %v1136
    %1602 = vmatmul.mubr.bf16.gmra.mrb[0].mxu0 %v1135
    %v1603 = vpop.f32.mrb[0].mxu0
    %v1604 = vadd.f32 %v1232, %v1603
    %v1605 = vpop.f32.mrb[0].mxu0
    %v1606 = vadd.f32 %v1236, %v1605
    %v1607 = vpop.f32.mrb[0].mxu0
    %v1608 = vadd.f32 %v1232, %v1607
    %v1609 = vpop.f32.mrb[0].mxu0
    %v1610 = vadd.f32 %v1236, %v1609
    %1611 = vmatprep.mubr.bf16.mxu0 %v1140
    %1612 = vmatmul.mubr.bf16.gmra.mrb[0].mxu0 %v1139
    %v1613 = vpop.f32.mrb[0].mxu0
    %v1614 = vadd.f32 %v1232, %v1613
    %v1615 = vpop.f32.mrb[0].mxu0
    %v1616 = vadd.f32 %v1236, %v1615
    %v1617 = vpop.f32.mrb[0].mxu0
    %v1618 = vadd.f32 %v1232, %v1617
    %v1619 = vpop.f32.mrb[0].mxu0
    %v1620 = vadd.f32 %v1236, %v1619
    %1621 = vmatprep.mubr.bf16.mxu0 %v1144
    %1622 = vmatmul.mubr.bf16.gmra.mrb[0].mxu0 %v1143
    %v1623 = vpop.f32.mrb[0].mxu0
    %v1624 = vadd.f32 %v1232, %v1623
    %v1625 = vpop.f32.mrb[0].mxu0
    %v1626 = vadd.f32 %v1236, %v1625
    %v1627 = vpop.f32.mrb[0].mxu0
    %v1628 = vadd.f32 %v1232, %v1627
    %v1629 = vpop.f32.mrb[0].mxu0
    %v1630 = vadd.f32 %v1236, %v1629
    %1631 = vmatprep.mubr.bf16.mxu0 %v1148
    %1632 = vmatmul.mubr.bf16.gmra.mrb[0].mxu0 %v1147
    %v1633 = vpop.f32.mrb[0].mxu0
    %v1634 = vadd.f32 %v1232, %v1633
    %v1635 = vpop.f32.mrb[0].mxu0
    %v1636 = vadd.f32 %v1236, %v1635
    %v1637 = vpop.f32.mrb[0].mxu0
    %v1638 = vadd.f32 %v1232, %v1637
    %v1639 = vpop.f32.mrb[0].mxu0
    %v1640 = vadd.f32 %v1236, %v1639
    %1641 = vmatprep.mubr.bf16.mxu0 %v1152
    %1642 = vmatmul.mubr.bf16.gmra.mrb[0].mxu0 %v1151
    %v1643 = vpop.f32.mrb[0].mxu0
    %v1644 = vadd.f32 %v1232, %v1643
    %v1645 = vpop.f32.mrb[0].mxu0
    %v1646 = vadd.f32 %v1236, %v1645
    %v1647 = vpop.f32.mrb[0].mxu0
    %v1648 = vadd.f32 %v1232, %v1647
    %v1649 = vpop.f32.mrb[0].mxu0
    %v1650 = vadd.f32 %v1236, %v1649
    %1651 = vmatprep.mubr.bf16.mxu0 %v1156
    %1652 = vmatmul.mubr.bf16.gmra.mrb[0].mxu0 %v1155
    %v1653 = vpop.f32.mrb[0].mxu0
    %v1654 = vadd.f32 %v1232, %v1653
    %v1655 = vpop.f32.mrb[0].mxu0
    %v1656 = vadd.f32 %v1236, %v1655
    %v1657 = vpop.f32.mrb[0].mxu0
    %v1658 = vadd.f32 %v1232, %v1657
    %v1659 = vpop.f32.mrb[0].mxu0
    %v1660 = vadd.f32 %v1236, %v1659
    %1661 = vmatprep.mubr.bf16.mxu0 %v1160
    %1662 = vmatmul.mubr.bf16.gmra.mrb[0].mxu0 %v1159
    %v1663 = vpop.f32.mrb[0].mxu0
    %v1664 = vadd.f32 %v1232, %v1663
    %v1665 = vpop.f32.mrb[0].mxu0
    %v1666 = vadd.f32 %v1236, %v1665
    %v1667 = vpop.f32.mrb[0].mxu0
    %v1668 = vadd.f32 %v1232, %v1667
    %v1669 = vpop.f32.mrb[0].mxu0
    %v1670 = vadd.f32 %v1236, %v1669
    %1671 = vdwg.mxu0
    %1672 = vmatprep.subr.bf16.mxu0 %v1464
    %1673 = vmatpush1.bf16.msra.mxu0 %v1463
    %1674 = vmatprep.subr.bf16.mxu0 %v1466
    %1675 = vmatpush1.bf16.msra.mxu0 %v1465
    %1676 = vmatprep.subr.bf16.mxu0 %v1468
    %1677 = vmatpush1.bf16.msra.mxu0 %v1467
    %1678 = vmatprep.subr.bf16.mxu0 %v1470
    %1679 = vmatpush1.bf16.msra.mxu0 %v1469
    %1680 = vmatprep.subr.bf16.mxu0 %v1472
    %1681 = vmatpush1.bf16.msra.mxu0 %v1471
    %1682 = vmatprep.subr.bf16.mxu0 %v1474
    %1683 = vmatpush1.bf16.msra.mxu0 %v1473
    %1684 = vmatprep.subr.bf16.mxu0 %v1476
    %1685 = vmatpush1.bf16.msra.mxu0 %v1475
    %1686 = vmatprep.subr.bf16.mxu0 %v1478
    %1687 = vmatpush1.bf16.msra.mxu0 %v1477
    %1688 = vmatprep.subr.bf16.mxu0 %v1480
    %1689 = vmatpush1.bf16.msra.mxu0 %v1479
    %1690 = vmatprep.subr.bf16.mxu0 %v1482
    %1691 = vmatpush1.bf16.msra.mxu0 %v1481
    %1692 = vmatprep.subr.bf16.mxu0 %v1484
    %1693 = vmatpush1.bf16.msra.mxu0 %v1483
    %1694 = vmatprep.subr.bf16.mxu0 %v1486
    %1695 = vmatpush1.bf16.msra.mxu0 %v1485
    %1696 = vmatprep.subr.bf16.mxu0 %v1488
    %1697 = vmatpush1.bf16.msra.mxu0 %v1487
    %1698 = vmatprep.subr.bf16.mxu0 %v1490
    %1699 = vmatpush1.bf16.msra.mxu0 %v1489
    %1700 = vmatprep.subr.bf16.mxu0 %v1492
    %1701 = vmatpush1.bf16.msra.mxu0 %v1491
    %1702 = vmatprep.subr.bf16.mxu0 %v1494
    %1703 = vmatpush1.bf16.msra.mxu0 %v1493
    %1704 = vmatprep.mubr.bf16.mxu0 %v1134
    %1705 = vmatmul.mubr.bf16.gmra.mrb[0].mxu0 %v1133
    %v1706 = vpop.f32.mrb[0].mxu0
    %v1707 = vadd.f32 %v1594, %v1706
    %v1708 = vpop.f32.mrb[0].mxu0
    %v1709 = vadd.f32 %v1596, %v1708
    %v1710 = vpop.f32.mrb[0].mxu0
    %v1711 = vadd.f32 %v1598, %v1710
    %v1712 = vpop.f32.mrb[0].mxu0
    %v1713 = vadd.f32 %v1600, %v1712
    %1714 = vmatprep.mubr.bf16.mxu0 %v1138
    %1715 = vmatmul.mubr.bf16.gmra.mrb[0].mxu0 %v1137
    %v1716 = vpop.f32.mrb[0].mxu0
    %v1717 = vadd.f32 %v1604, %v1716
    %v1718 = vpop.f32.mrb[0].mxu0
    %v1719 = vadd.f32 %v1606, %v1718
    %v1720 = vpop.f32.mrb[0].mxu0
    %v1721 = vadd.f32 %v1608, %v1720
    %v1722 = vpop.f32.mrb[0].mxu0
    %v1723 = vadd.f32 %v1610, %v1722
    %1724 = vmatprep.mubr.bf16.mxu0 %v1142
    %1725 = vmatmul.mubr.bf16.gmra.mrb[0].mxu0 %v1141
    %v1726 = vpop.f32.mrb[0].mxu0
    %v1727 = vadd.f32 %v1614, %v1726
    %v1728 = vpop.f32.mrb[0].mxu0
    %v1729 = vadd.f32 %v1616, %v1728
    %v1730 = vpop.f32.mrb[0].mxu0
    %v1731 = vadd.f32 %v1618, %v1730
    %v1732 = vpop.f32.mrb[0].mxu0
    %v1733 = vadd.f32 %v1620, %v1732
    %1734 = vmatprep.mubr.bf16.mxu0 %v1146
    %1735 = vmatmul.mubr.bf16.gmra.mrb[0].mxu0 %v1145
    %v1736 = vpop.f32.mrb[0].mxu0
    %v1737 = vadd.f32 %v1624, %v1736
    %v1738 = vpop.f32.mrb[0].mxu0
    %v1739 = vadd.f32 %v1626, %v1738
    %v1740 = vpop.f32.mrb[0].mxu0
    %v1741 = vadd.f32 %v1628, %v1740
    %v1742 = vpop.f32.mrb[0].mxu0
    %v1743 = vadd.f32 %v1630, %v1742
    %1744 = vmatprep.mubr.bf16.mxu0 %v1150
    %1745 = vmatmul.mubr.bf16.gmra.mrb[0].mxu0 %v1149
    %v1746 = vpop.f32.mrb[0].mxu0
    %v1747 = vadd.f32 %v1634, %v1746
    %v1748 = vpop.f32.mrb[0].mxu0
    %v1749 = vadd.f32 %v1636, %v1748
    %v1750 = vpop.f32.mrb[0].mxu0
    %v1751 = vadd.f32 %v1638, %v1750
    %v1752 = vpop.f32.mrb[0].mxu0
    %v1753 = vadd.f32 %v1640, %v1752
    %1754 = vmatprep.mubr.bf16.mxu0 %v1154
    %1755 = vmatmul.mubr.bf16.gmra.mrb[0].mxu0 %v1153
    %v1756 = vpop.f32.mrb[0].mxu0
    %v1757 = vadd.f32 %v1644, %v1756
    %v1758 = vpop.f32.mrb[0].mxu0
    %v1759 = vadd.f32 %v1646, %v1758
    %v1760 = vpop.f32.mrb[0].mxu0
    %v1761 = vadd.f32 %v1648, %v1760
    %v1762 = vpop.f32.mrb[0].mxu0
    %v1763 = vadd.f32 %v1650, %v1762
    %1764 = vmatprep.mubr.bf16.mxu0 %v1158
    %1765 = vmatmul.mubr.bf16.gmra.mrb[0].mxu0 %v1157
    %v1766 = vpop.f32.mrb[0].mxu0
    %v1767 = vadd.f32 %v1654, %v1766
    %v1768 = vpop.f32.mrb[0].mxu0
    %v1769 = vadd.f32 %v1656, %v1768
    %v1770 = vpop.f32.mrb[0].mxu0
    %v1771 = vadd.f32 %v1658, %v1770
    %v1772 = vpop.f32.mrb[0].mxu0
    %v1773 = vadd.f32 %v1660, %v1772
    %1774 = vmatprep.mubr.bf16.mxu0 %v1162
    %1775 = vmatmul.mubr.bf16.gmra.mrb[0].mxu0 %v1161
    %v1776 = vpop.f32.mrb[0].mxu0
    %v1777 = vadd.f32 %v1664, %v1776
    %v1778 = vpop.f32.mrb[0].mxu0
    %v1779 = vadd.f32 %v1666, %v1778
    %v1780 = vpop.f32.mrb[0].mxu0
    %v1781 = vadd.f32 %v1668, %v1780
    %v1782 = vpop.f32.mrb[0].mxu0
    %v1783 = vadd.f32 %v1670, %v1782
    %1784 = vdwg.mxu0
    %v1785 = vmax.f32 %v1707, 0.0
    %v1786 = vmax.f32 %v1709, 0.0
    %v1787 = vmax.f32 %v1711, 0.0
    %v1788 = vmax.f32 %v1713, 0.0
    %v1789 = vmax.f32 %v1717, 0.0
    %v1790 = vmax.f32 %v1719, 0.0
    %v1791 = vmax.f32 %v1721, 0.0
    %v1792 = vmax.f32 %v1723, 0.0
    %v1793 = vmax.f32 %v1727, 0.0
    %v1794 = vmax.f32 %v1729, 0.0
    %v1795 = vmax.f32 %v1731, 0.0
    %v1796 = vmax.f32 %v1733, 0.0
    %v1797 = vmax.f32 %v1737, 0.0
    %v1798 = vmax.f32 %v1739, 0.0
    %v1799 = vmax.f32 %v1741, 0.0
    %v1800 = vmax.f32 %v1743, 0.0
    %v1801 = vmax.f32 %v1747, 0.0
    %v1802 = vmax.f32 %v1749, 0.0
    %v1803 = vmax.f32 %v1751, 0.0
    %v1804 = vmax.f32 %v1753, 0.0
    %v1805 = vmax.f32 %v1757, 0.0
    %v1806 = vmax.f32 %v1759, 0.0
    %v1807 = vmax.f32 %v1761, 0.0
    %v1808 = vmax.f32 %v1763, 0.0
    %v1809 = vmax.f32 %v1767, 0.0
    %v1810 = vmax.f32 %v1769, 0.0
    %v1811 = vmax.f32 %v1771, 0.0
    %v1812 = vmax.f32 %v1773, 0.0
    %v1813 = vmax.f32 %v1777, 0.0
    %v1814 = vmax.f32 %v1779, 0.0
    %v1815 = vmax.f32 %v1781, 0.0
    %v1816 = vmax.f32 %v1783, 0.0
    %v1817 = vpack.c.bf16 %v1787, %v1785
    %v1818 = vpack.c.bf16 %v1788, %v1786
    %v1819 = vpack.c.bf16 %v1791, %v1789
    %v1820 = vpack.c.bf16 %v1792, %v1790
    %v1821 = vpack.c.bf16 %v1795, %v1793
    %v1822 = vpack.c.bf16 %v1796, %v1794
    %v1823 = vpack.c.bf16 %v1799, %v1797
    %v1824 = vpack.c.bf16 %v1800, %v1798
    %v1825 = vpack.c.bf16 %v1803, %v1801
    %v1826 = vpack.c.bf16 %v1804, %v1802
    %v1827 = vpack.c.bf16 %v1807, %v1805
    %v1828 = vpack.c.bf16 %v1808, %v1806
    %v1829 = vpack.c.bf16 %v1811, %v1809
    %v1830 = vpack.c.bf16 %v1812, %v1810
    %v1831 = vpack.c.bf16 %v1815, %v1813
    %v1832 = vpack.c.bf16 %v1816, %v1814
    %v1833 = vld [vmem:[#allocation10] sm:$0xf]
    %v1834 = vld [vmem:[#allocation10 + $0x4] sm:$0xf]
    %v1835 = vld [vmem:[#allocation10 + $0x8] sm:$0xf]
    %v1836 = vld [vmem:[#allocation10 + $0xc] sm:$0xf]
    %v1837 = vld [vmem:[#allocation10 + $0x10] sm:$0xf]
    %v1838 = vld [vmem:[#allocation10 + $0x14] sm:$0xf]
    %v1839 = vld [vmem:[#allocation10 + $0x18] sm:$0xf]
    %v1840 = vld [vmem:[#allocation10 + $0x1c] sm:$0xf]
    %v1841 = vld [vmem:[#allocation10 + $0x20] sm:$0xf]
    %v1842 = vld [vmem:[#allocation10 + $0x24] sm:$0xf]
    %v1843 = vld [vmem:[#allocation10 + $0x28] sm:$0xf]
    %v1844 = vld [vmem:[#allocation10 + $0x2c] sm:$0xf]
    %v1845 = vld [vmem:[#allocation10 + $0x30] sm:$0xf]
    %v1846 = vld [vmem:[#allocation10 + $0x34] sm:$0xf]
    %v1847 = vld [vmem:[#allocation10 + $0x38] sm:$0xf]
    %v1848 = vld [vmem:[#allocation10 + $0x3c] sm:$0xf]
    %v1849 = vld [vmem:[#allocation10 + $0x40] sm:$0xf]
    %v1850 = vld [vmem:[#allocation10 + $0x44] sm:$0xf]
    %v1851 = vld [vmem:[#allocation10 + $0x48] sm:$0xf]
    %v1852 = vld [vmem:[#allocation10 + $0x4c] sm:$0xf]
    %v1853 = vld [vmem:[#allocation10 + $0x50] sm:$0xf]
    %v1854 = vld [vmem:[#allocation10 + $0x54] sm:$0xf]
    %v1855 = vld [vmem:[#allocation10 + $0x58] sm:$0xf]
    %v1856 = vld [vmem:[#allocation10 + $0x5c] sm:$0xf]
    %v1857 = vld [vmem:[#allocation10 + $0x60] sm:$0xf]
    %v1858 = vld [vmem:[#allocation10 + $0x64] sm:$0xf]
    %v1859 = vld [vmem:[#allocation10 + $0x68] sm:$0xf]
    %v1860 = vld [vmem:[#allocation10 + $0x6c] sm:$0xf]
    %v1861 = vld [vmem:[#allocation10 + $0x70] sm:$0xf]
    %v1862 = vld [vmem:[#allocation10 + $0x74] sm:$0xf]
    %v1863 = vld [vmem:[#allocation10 + $0x78] sm:$0xf]
    %v1864 = vld [vmem:[#allocation10 + $0x7c] sm:$0xf]
    %v1865 = vld [vmem:[%s8] sm:$0x1]
    %v1867 = vlaneseq
    %v1868 = vshrl.u32 %v1867, 7
    %v1869 = vsub.s32 0, %v1868
    %v1870 = vrot.slane %v1865, %v1869
    %v1904 = vunpack.c.l.b16 %v1833
    %v1905 = vunpack.c.l.b16 %v1834
    %v1906 = vunpack.c.l.b16 %v1835
    %v1907 = vunpack.c.l.b16 %v1836
    %v1908 = vunpack.c.l.b16 %v1837
    %v1909 = vunpack.c.l.b16 %v1838
    %v1910 = vunpack.c.l.b16 %v1839
    %v1911 = vunpack.c.l.b16 %v1840
    %v1912 = vunpack.c.l.b16 %v1841
    %v1913 = vunpack.c.l.b16 %v1842
    %v1914 = vunpack.c.l.b16 %v1843
    %v1915 = vunpack.c.l.b16 %v1844
    %v1916 = vunpack.c.l.b16 %v1845
    %v1917 = vunpack.c.l.b16 %v1846
    %v1918 = vunpack.c.l.b16 %v1847
    %v1919 = vunpack.c.l.b16 %v1848
    %v1920 = vunpack.c.l.b16 %v1849
    %v1921 = vunpack.c.l.b16 %v1850
    %v1922 = vunpack.c.l.b16 %v1851
    %v1923 = vunpack.c.l.b16 %v1852
    %v1924 = vunpack.c.l.b16 %v1853
    %v1925 = vunpack.c.l.b16 %v1854
    %v1926 = vunpack.c.l.b16 %v1855
    %v1927 = vunpack.c.l.b16 %v1856
    %v1928 = vunpack.c.l.b16 %v1857
    %v1929 = vunpack.c.l.b16 %v1858
    %v1930 = vunpack.c.l.b16 %v1859
    %v1931 = vunpack.c.l.b16 %v1860
    %v1932 = vunpack.c.l.b16 %v1861
    %v1933 = vunpack.c.l.b16 %v1862
    %v1934 = vunpack.c.l.b16 %v1863
    %v1935 = vunpack.c.l.b16 %v1864
    %v1936 = vpack.c.b16 %v1905, %v1904
    %v1937 = vpack.c.b16 %v1907, %v1906
    %v1938 = vpack.c.b16 %v1909, %v1908
    %v1939 = vpack.c.b16 %v1911, %v1910
    %v1940 = vpack.c.b16 %v1913, %v1912
    %v1941 = vpack.c.b16 %v1915, %v1914
    %v1942 = vpack.c.b16 %v1917, %v1916
    %v1943 = vpack.c.b16 %v1919, %v1918
    %v1944 = vpack.c.b16 %v1921, %v1920
    %v1945 = vpack.c.b16 %v1923, %v1922
    %v1946 = vpack.c.b16 %v1925, %v1924
    %v1947 = vpack.c.b16 %v1927, %v1926
    %v1948 = vpack.c.b16 %v1929, %v1928
    %v1949 = vpack.c.b16 %v1931, %v1930
    %v1950 = vpack.c.b16 %v1933, %v1932
    %v1951 = vpack.c.b16 %v1935, %v1934
    %1968 = vmatprep.subr.bf16.mxu0 0
    %1969 = vmatpush1.bf16.msra.mxu0 %v1936
    %1970 = vmatprep.subr.bf16.mxu0 0
    %1971 = vmatpush1.bf16.msra.mxu0 %v1937
    %1972 = vmatprep.subr.bf16.mxu0 0
    %1973 = vmatpush1.bf16.msra.mxu0 %v1938
    %1974 = vmatprep.subr.bf16.mxu0 0
    %1975 = vmatpush1.bf16.msra.mxu0 %v1939
    %1976 = vmatprep.subr.bf16.mxu0 0
    %1977 = vmatpush1.bf16.msra.mxu0 %v1940
    %1978 = vmatprep.subr.bf16.mxu0 0
    %1979 = vmatpush1.bf16.msra.mxu0 %v1941
    %1980 = vmatprep.subr.bf16.mxu0 0
    %1981 = vmatpush1.bf16.msra.mxu0 %v1942
    %1982 = vmatprep.subr.bf16.mxu0 0
    %1983 = vmatpush1.bf16.msra.mxu0 %v1943
    %1984 = vmatprep.subr.bf16.mxu0 0
    %1985 = vmatpush1.bf16.msra.mxu0 %v1944
    %1986 = vmatprep.subr.bf16.mxu0 0
    %1987 = vmatpush1.bf16.msra.mxu0 %v1945
    %1988 = vmatprep.subr.bf16.mxu0 0
    %1989 = vmatpush1.bf16.msra.mxu0 %v1946
    %1990 = vmatprep.subr.bf16.mxu0 0
    %1991 = vmatpush1.bf16.msra.mxu0 %v1947
    %1992 = vmatprep.subr.bf16.mxu0 0
    %1993 = vmatpush1.bf16.msra.mxu0 %v1948
    %1994 = vmatprep.subr.bf16.mxu0 0
    %1995 = vmatpush1.bf16.msra.mxu0 %v1949
    %1996 = vmatprep.subr.bf16.mxu0 0
    %1997 = vmatpush1.bf16.msra.mxu0 %v1950
    %1998 = vmatprep.subr.bf16.mxu0 0
    %1999 = vmatpush1.bf16.msra.mxu0 %v1951
    %2000 = vmatprep.mubr.bf16.mxu0 %v1818
    %2001 = vmatmul.mubr.bf16.gmra.mrb[0].mxu0 %v1817
    %v2002 = vpop.f32.mrb[0].mxu0
    %v2003 = vadd.f32 %v1870, %v2002
    %v2004 = vpop.f32.mrb[0].mxu0
    %v2005 = vpop.f32.mrb[0].mxu0
    %v2006 = vadd.f32 %v1870, %v2005
    %v2007 = vpop.f32.mrb[0].mxu0
    %2008 = vmatprep.mubr.bf16.mxu0 %v1820
    %2009 = vmatmul.mubr.bf16.gmra.mrb[0].mxu0 %v1819
    %v2010 = vpop.f32.mrb[0].mxu0
    %v2011 = vadd.f32 %v1870, %v2010
    %v2012 = vpop.f32.mrb[0].mxu0
    %v2013 = vpop.f32.mrb[0].mxu0
    %v2014 = vadd.f32 %v1870, %v2013
    %v2015 = vpop.f32.mrb[0].mxu0
    %2016 = vmatprep.mubr.bf16.mxu0 %v1822
    %2017 = vmatmul.mubr.bf16.gmra.mrb[0].mxu0 %v1821
    %v2018 = vpop.f32.mrb[0].mxu0
    %v2019 = vadd.f32 %v1870, %v2018
    %v2020 = vpop.f32.mrb[0].mxu0
    %v2021 = vpop.f32.mrb[0].mxu0
    %v2022 = vadd.f32 %v1870, %v2021
    %v2023 = vpop.f32.mrb[0].mxu0
    %2024 = vmatprep.mubr.bf16.mxu0 %v1824
    %2025 = vmatmul.mubr.bf16.gmra.mrb[0].mxu0 %v1823
    %v2026 = vpop.f32.mrb[0].mxu0
    %v2027 = vadd.f32 %v1870, %v2026
    %v2028 = vpop.f32.mrb[0].mxu0
    %v2029 = vpop.f32.mrb[0].mxu0
    %v2030 = vadd.f32 %v1870, %v2029
    %v2031 = vpop.f32.mrb[0].mxu0
    %2032 = vmatprep.mubr.bf16.mxu0 %v1826
    %2033 = vmatmul.mubr.bf16.gmra.mrb[0].mxu0 %v1825
    %v2034 = vpop.f32.mrb[0].mxu0
    %v2035 = vadd.f32 %v1870, %v2034
    %v2036 = vpop.f32.mrb[0].mxu0
    %v2037 = vpop.f32.mrb[0].mxu0
    %v2038 = vadd.f32 %v1870, %v2037
    %v2039 = vpop.f32.mrb[0].mxu0
    %2040 = vmatprep.mubr.bf16.mxu0 %v1828
    %2041 = vmatmul.mubr.bf16.gmra.mrb[0].mxu0 %v1827
    %v2042 = vpop.f32.mrb[0].mxu0
    %v2043 = vadd.f32 %v1870, %v2042
    %v2044 = vpop.f32.mrb[0].mxu0
    %v2045 = vpop.f32.mrb[0].mxu0
    %v2046 = vadd.f32 %v1870, %v2045
    %v2047 = vpop.f32.mrb[0].mxu0
    %2048 = vmatprep.mubr.bf16.mxu0 %v1830
    %2049 = vmatmul.mubr.bf16.gmra.mrb[0].mxu0 %v1829
    %v2050 = vpop.f32.mrb[0].mxu0
    %v2051 = vadd.f32 %v1870, %v2050
    %v2052 = vpop.f32.mrb[0].mxu0
    %v2053 = vpop.f32.mrb[0].mxu0
    %v2054 = vadd.f32 %v1870, %v2053
    %v2055 = vpop.f32.mrb[0].mxu0
    %2056 = vmatprep.mubr.bf16.mxu0 %v1832
    %2057 = vmatmul.mubr.bf16.gmra.mrb[0].mxu0 %v1831
    %v2058 = vpop.f32.mrb[0].mxu0
    %v2059 = vadd.f32 %v1870, %v2058
    %v2060 = vpop.f32.mrb[0].mxu0
    %v2061 = vpop.f32.mrb[0].mxu0
    %v2062 = vadd.f32 %v1870, %v2061
    %v2063 = vpop.f32.mrb[0].mxu0
    %2064 = vdwg.mxu0
    %2065 = vst [vmem:[#allocation11] sm:$0xff] %v2003
    %2066 = vst [vmem:[#allocation11 + $0x8] sm:$0xff] %v2006
    %2067 = vst [vmem:[#allocation11 + $0x10] sm:$0xff] %v2011
    %2068 = vst [vmem:[#allocation11 + $0x18] sm:$0xff] %v2014
    %2069 = vst [vmem:[#allocation11 + $0x20] sm:$0xff] %v2019
    %2070 = vst [vmem:[#allocation11 + $0x28] sm:$0xff] %v2022
    %2071 = vst [vmem:[#allocation11 + $0x30] sm:$0xff] %v2027
    %2072 = vst [vmem:[#allocation11 + $0x38] sm:$0xff] %v2030
    %2073 = vst [vmem:[#allocation11 + $0x40] sm:$0xff] %v2035
    %2074 = vst [vmem:[#allocation11 + $0x48] sm:$0xff] %v2038
    %2075 = vst [vmem:[#allocation11 + $0x50] sm:$0xff] %v2043
    %2076 = vst [vmem:[#allocation11 + $0x58] sm:$0xff] %v2046
    %2077 = vst [vmem:[#allocation11 + $0x60] sm:$0xff] %v2051
    %2078 = vst [vmem:[#allocation11 + $0x68] sm:$0xff] %v2054
    %2079 = vst [vmem:[#allocation11 + $0x70] sm:$0xff] %v2059
    %2080 = vst [vmem:[#allocation11 + $0x78] sm:$0xff] %v2062
    // Predicated region
    $region58: #{tpu_custom_call.1} parent=1 // pred_check
      _
    $region59: #{tpu_custom_call.1} parent=1 // pred_check_branch
      %2082 = sbr.rel (0) target = $region61
    $region60: #{tpu_custom_call.1} parent=1 // pred_region
      %s2084 = ssub.s32 2048, 2048
      %2085 = vsyncadd [#allocation4], %s2084
      %s2086 = sshll.u32 [#allocation11], 4
      %s2087 = int_to_ptr.vmem [resolvable:$true] %s2086
      %2092 = dma.vmem_to_hbm [thread:$0]  %s2087, 2048, %s9, [#allocation4], 128, 128, 8
    $region61: #{tpu_custom_call.1} parent=1 // pred_fallthru
      _
    // Predicated region
    $region62: #{tpu_custom_call.1} parent=1 // pred_check
      _
    $region63: #{tpu_custom_call.1} parent=1 // pred_check_branch
      %2094 = sbr.rel (0) target = $region65
    $region64: #{tpu_custom_call.1} parent=1 // pred_region
      %2095 = dma.done [#allocation4], 2048
    $region65: #{tpu_custom_call.1} parent=1 // pred_fallthru
      _
    %2096 = vsyncpa [#allocation3], 1
    %2097 = vsyncpa [#allocation6], 1
    %2098 = vsyncpa [#allocation9], 1
    %2099 = vsyncpa [#allocation4], 1

</llo_original>
